<compile_context>
chip_gen: v6e
topology: v6e:2x2x1
jax: 0.10.0
libtpu: 0.0.40
codegen_flags: <defaults>
</compile_context>

<pallas_src>
import functools

import jax
import jax.numpy as jnp
from jax.experimental import pallas as pl
from jax.experimental.pallas import tpu as pltpu

KSIZE = 7
PAD = KSIZE // 2  # 3


def _sa_kernel(x_ref, w_ref, b_ref, o_ref, max_sc, sum_sc, *,
               C, H, W, needs_c_mask):
    """One (batch-block, channel-tile) grid step.

    x_ref  : (bb, cb, H*W) VMEM  activations (spatial dims flattened, lane-dense)
    w_ref  : (98,)         SMEM  conv weight, [c][di][dj]; c=0 max map, c=1 avg map
    b_ref  : (1,)          SMEM  conv bias
    o_ref  : (bb, 1, H*W)  VMEM  sigmoid(conv(...)) output
    max_sc : (bb, H*W) f32 VMEM  running channel max
    sum_sc : (bb, H*W) f32 VMEM  running channel sum
    """
    HW = H * W
    ci = pl.program_id(1)
    bb = max_sc.shape[0]
    cb = x_ref.shape[1]

    # ---- phase 1: fused single-pass channel max + sum over this C tile ----
    @pl.when(ci == 0)
    def _init():
        max_sc[...] = jnp.full(max_sc.shape, -jnp.inf, dtype=max_sc.dtype)
        sum_sc[...] = jnp.zeros(sum_sc.shape, dtype=sum_sc.dtype)

    xv = x_ref[...].astype(jnp.float32)                        # (bb, cb, HW)
    if needs_c_mask:
        # Ragged last channel tile: mask channels >= C (-inf for max, 0 for sum).
        ch = ci * cb + jax.lax.broadcasted_iota(jnp.int32, (1, cb, 1), 1)
        valid = ch < C
        x_max = jnp.where(valid, xv, -jnp.inf)
        x_sum = jnp.where(valid, xv, 0.0)
    else:
        x_max = xv
        x_sum = xv
    max_sc[...] = jnp.maximum(max_sc[...], jnp.max(x_max, axis=1))
    sum_sc[...] = sum_sc[...] + jnp.sum(x_sum, axis=1)

    # ---- phase 2: 7x7 conv (2->1 ch, zero pad 3) + sigmoid, last tile only --
    @pl.when(ci == pl.num_programs(1) - 1)
    def _finalize():
        inv_c = jnp.float32(1.0 / C)
        bb2 = 2 * bb
        # Stack the max map (rows [0:bb]) and avg map (rows [bb:2bb]) so every
        # roll / mask / FMA below runs on the whole batch block at once.
        maps = jnp.concatenate([max_sc[...], sum_sc[...] * inv_c], axis=0)

        # Boundary masks generated in-kernel (no f32 mask inputs / DMA).
        idx = jax.lax.broadcasted_iota(jnp.int32, (1, HW), 1)
        if (W & (W - 1)) == 0:
            col = idx & (W - 1)
            row = idx >> (W.bit_length() - 1)
        else:
            col = idx % W
            row = idx // W
        cmask = [(col + (dj - PAD) >= 0) & (col + (dj - PAD) < W)
                 for dj in range(KSIZE)]                        # (1, HW) bool
        rmask = [(row + (di - PAD) >= 0) & (row + (di - PAD) < H)
                 for di in range(KSIZE)]

        # Per-row weight selector: rows < bb use the "max" channel weights.
        row_is_max = jax.lax.broadcasted_iota(jnp.int32, (bb2, 1), 0) < bb
        bias = b_ref[0]

        # 7 column (dj) shifts of the stacked slab: one lane roll + mask each.
        shifted = []
        for dj in range(KSIZE):
            off = dj - PAD
            s = maps if off == 0 else pltpu.roll(maps, shift=(-off) % HW, axis=1)
            shifted.append(jnp.where(cmask[dj], s, 0.0))

        # Per row offset di: weighted sum of the 7 column taps (VPU FMAs on the
        # full (2*bb, HW) slab), then ONE row roll + row mask.
        acc = jnp.zeros((bb2, HW), jnp.float32)
        for di in range(KSIZE):
            part = jnp.zeros((bb2, HW), jnp.float32)
            for dj in range(KSIZE):
                w_max = w_ref[di * KSIZE + dj]
                w_avg = w_ref[KSIZE * KSIZE + di * KSIZE + dj]
                scale = jnp.where(row_is_max, w_max, w_avg)     # (2*bb, 1)
                part = part + scale * shifted[dj]
            offr = di - PAD
            pr = part if offr == 0 else pltpu.roll(
                part, shift=(-offr * W) % HW, axis=1)
            acc = acc + jnp.where(rmask[di], pr, 0.0)

        # Sum the two channel halves, add bias, sigmoid, store lane-dense.
        total = acc[:bb, :] + acc[bb:, :] + bias                # (bb, HW)
        o_ref[...] = jax.nn.sigmoid(total)[:, None, :].astype(o_ref.dtype)


def _vmem_capacity_bytes():
    try:
        info = pltpu.get_tpu_info()
        return int(getattr(info, "vmem_capacity_bytes", 64 << 20))
    except Exception:
        return 64 << 20  # conservative (v7x-sized) fallback


def _pick_b_block(B):
    """Largest divisor of B that still leaves >=2 steps on the parallel batch
    axis (so both v7x TensorCores get work); 1-TC chips lose little."""
    if B <= 1:
        return 1
    for bb in (8, 4, 2, 1):
        if B % bb == 0 and B // bb >= 2:
            return bb
    return 1


def _pick_c_block(C, bb, HW, itemsize, budget_bytes):
    """Largest C tile under the budget, multiple of the dtype sublane packing
    (8 f32 / 16 bf16 / 32 int8). Ragged last tile is masked in-kernel."""
    pack = max(8, 32 // itemsize)
    per_c = bb * HW * itemsize
    max_c = max(1, budget_bytes // per_c)
    if C <= max_c:
        return C                       # whole channel dim (full-dim block is legal)
    cb = max(pack, (max_c // pack) * pack)
    return min(cb, C)


@jax.jit
def spatial_attention(x, w_flat, bias):
    """sigmoid(Conv2d(2,1,7,pad=3)(cat([max_c(x), mean_c(x)], 1))) in Pallas."""
    B, C, H, W = x.shape
    HW = H * W
    itemsize = jnp.dtype(x.dtype).itemsize

    bb = _pick_b_block(B)

    # VMEM sizing: cap at 75% of physical VMEM (<=48 MiB v7x, <=~96 MiB v5e/v6e),
    # account for scratch, the (double-buffered) output block and the finalize
    # temporaries (7 shifted copies + maps/part/acc) in addition to the input.
    vmem_cap = _vmem_capacity_bytes()
    safe_cap = min((vmem_cap * 3) // 4, 100 << 20)
    fixed = (bb * HW * 4 * 2                 # max/sum f32 scratch
             + 2 * bb * HW * itemsize        # double-buffered output block
             + 12 * (2 * bb) * HW * 4)       # finalize live temporaries (f32)
    budget = min(16 << 20, max(256 << 10, (safe_cap - fixed) // 3))

    cb = _pick_c_block(C, bb, HW, itemsize, budget)
    num_c = -(-C // cb)                      # cdiv grid; ragged tail masked in-kernel
    needs_c_mask = (num_c * cb != C)

    in_block = bb * cb * HW * itemsize
    vmem_limit = int(min(safe_cap, max(16 << 20, 2 * in_block + fixed + (4 << 20))))

    # Lane-dense layout; contiguous (free) reshape.
    # TODO(synk): on v5e, casting x to bf16 here (keeping the f32 accumulation
    # below) roughly halves the HBM-bound phase-1 time at a small numeric cost.
    x2 = x.reshape(B, C, HW)

    kernel = functools.partial(_sa_kernel, C=C, H=H, W=W,
                               needs_c_mask=needs_c_mask)

    out = pl.pallas_call(
        kernel,
        out_shape=jax.ShapeDtypeStruct((B, 1, HW), x.dtype),
        grid=(B // bb, num_c),
        in_specs=[
            pl.BlockSpec((bb, cb, HW), lambda b, ci: (b, ci, 0)),
            pl.BlockSpec(memory_space=pltpu.MemorySpace.SMEM),
            pl.BlockSpec(memory_space=pltpu.MemorySpace.SMEM),
        ],
        out_specs=pl.BlockSpec((bb, 1, HW), lambda b, ci: (b, 0, 0)),
        scratch_shapes=[
            pltpu.VMEM((bb, HW), jnp.float32),   # running channel max
            pltpu.VMEM((bb, HW), jnp.float32),   # running channel sum
        ],
        compiler_params=pltpu.CompilerParams(
            dimension_semantics=("parallel", "arbitrary"),
            vmem_limit_bytes=vmem_limit),
    )(x2, w_flat, bias)
    return out.reshape(B, 1, H, W)


def _reference(x, w_flat, bias):
    # Pure-JAX reference of the PyTorch SpatialAttention forward.
    max_r = jnp.max(x, axis=1, keepdims=True)
    avg_r = jnp.mean(x, axis=1, keepdims=True)
    r = jnp.concatenate([max_r, avg_r], axis=1)                   # (B, 2, H, W)
    w = w_flat.reshape(1, 2, KSIZE, KSIZE)                        # OIHW
    out = jax.lax.conv_general_dilated(
        r, w, window_strides=(1, 1), padding=[(PAD, PAD), (PAD, PAD)],
        dimension_numbers=("NCHW", "OIHW", "NCHW"))
    return jax.nn.sigmoid(out + bias.reshape(1, 1, 1, 1))


if __name__ == "__main__":
    key = jax.random.PRNGKey(0)
    kx, kw, kb = jax.random.split(key, 3)

    # Small NCHW input consistent with the module's forward.
    x = jax.random.normal(kx, (2, 4, 16, 16), dtype=jnp.float32)

    # Conv2d(2, 1, kernel_size=7): weight (1, 2, 7, 7) flattened to (98,),
    # bias (1,) — deterministic synthetic parameters.
    w_flat = (jax.random.normal(kw, (2 * KSIZE * KSIZE,), dtype=jnp.float32)
              * 0.1)
    bias = jax.random.normal(kb, (1,), dtype=jnp.float32) * 0.1

    out = spatial_attention(x, w_flat, bias)
    jax.block_until_ready(out)

    ref = _reference(x, w_flat, bias)
    assert out.shape == (2, 1, 16, 16)
    assert jnp.allclose(out, ref, atol=2e-5, rtol=2e-5), "mismatch vs reference"

    print("KERNEL_OK")
</pallas_src>

<mosaic_0001>
module attributes {stable_mosaic.version = 11 : i64} {
  func.func @_sa_kernel(%arg0: i32, %arg1: i32, %arg2: memref<1x4x256xf32, #tpu.memory_space<vmem>>, %arg3: memref<98xf32, #tpu.memory_space<smem>>, %arg4: memref<1xf32, #tpu.memory_space<smem>>, %arg5: memref<1x1x256xf32, #tpu.memory_space<vmem>>, %arg6: memref<1x256xf32, #tpu.memory_space<vmem>>, %arg7: memref<1x256xf32, #tpu.memory_space<vmem>>) attributes {dimension_semantics = [#tpu.dimension_semantics<parallel>, #tpu.dimension_semantics<arbitrary>], iteration_bounds = array<i64: 2, 1>, scalar_prefetch = 0 : i64, scratch_operands = 2 : i64, tpu.core_type = #tpu.core_type<tc>, window_params = [{transform_indices = @transform_0, window_bounds = array<i64: 1, 4, 256>}, {transform_indices = @transform_1, window_bounds = array<i64: 98>}, {transform_indices = @transform_2, window_bounds = array<i64: 1>}, {transform_indices = @transform_3, window_bounds = array<i64: 1, 1, 256>}]} {
    %c0_i32 = arith.constant 0 : i32
    %0 = arith.cmpi eq, %arg1, %c0_i32 : i32
    %1 = arith.extui %0 : i1 to i32
    %c0_i32_0 = arith.constant 0 : i32
    %2 = arith.cmpi ne, %1, %c0_i32_0 : i32
    scf.if %2 {
      %cst_14 = arith.constant 0xFF800000 : f32
      %15 = vector.broadcast %cst_14 : f32 to vector<1x256xf32>
      %c0_15 = arith.constant 0 : index
      %c0_16 = arith.constant 0 : index
      %16 = vector.load %arg6[%c0_15, %c0_16] : memref<1x256xf32, #tpu.memory_space<vmem>>, vector<1x256xf32>
      tpu.vector_store %arg6[%c0_15, %c0_16], %15 {strides = array<i32>} : memref<1x256xf32, #tpu.memory_space<vmem>>, vector<1x256xf32>,
      %cst_17 = arith.constant 0.000000e+00 : f32
      %17 = vector.broadcast %cst_17 : f32 to vector<1x256xf32>
      %c0_18 = arith.constant 0 : index
      %c0_19 = arith.constant 0 : index
      %18 = vector.load %arg7[%c0_18, %c0_19] : memref<1x256xf32, #tpu.memory_space<vmem>>, vector<1x256xf32>
      tpu.vector_store %arg7[%c0_18, %c0_19], %17 {strides = array<i32>} : memref<1x256xf32, #tpu.memory_space<vmem>>, vector<1x256xf32>,
    } else {
    }
    %c0 = arith.constant 0 : index
    %c0_1 = arith.constant 0 : index
    %c0_2 = arith.constant 0 : index
    %3 = vector.load %arg2[%c0, %c0_1, %c0_2] : memref<1x4x256xf32, #tpu.memory_space<vmem>>, vector<1x4x256xf32>
    %c0_3 = arith.constant 0 : index
    %c0_4 = arith.constant 0 : index
    %4 = vector.load %arg6[%c0_3, %c0_4] : memref<1x256xf32, #tpu.memory_space<vmem>>, vector<1x256xf32>
    %cst = arith.constant dense<0xFF800000> : vector<1x256xf32>
    %5 = vector.multi_reduction <maximumf>, %3, %cst [1] : vector<1x4x256xf32> to vector<1x256xf32>
    %6 = arith.maximumf %4, %5 : vector<1x256xf32>
    %c0_5 = arith.constant 0 : index
    %c0_6 = arith.constant 0 : index
    %7 = vector.load %arg6[%c0_5, %c0_6] : memref<1x256xf32, #tpu.memory_space<vmem>>, vector<1x256xf32>
    tpu.vector_store %arg6[%c0_5, %c0_6], %6 {strides = array<i32>} : memref<1x256xf32, #tpu.memory_space<vmem>>, vector<1x256xf32>,
    %c0_7 = arith.constant 0 : index
    %c0_8 = arith.constant 0 : index
    %8 = vector.load %arg7[%c0_7, %c0_8] : memref<1x256xf32, #tpu.memory_space<vmem>>, vector<1x256xf32>
    %cst_9 = arith.constant dense<0.000000e+00> : vector<1x256xf32>
    %9 = vector.multi_reduction <add>, %3, %cst_9 [1] : vector<1x4x256xf32> to vector<1x256xf32>
    %10 = arith.addf %8, %9 : vector<1x256xf32>
    %c0_10 = arith.constant 0 : index
    %c0_11 = arith.constant 0 : index
    %11 = vector.load %arg7[%c0_10, %c0_11] : memref<1x256xf32, #tpu.memory_space<vmem>>, vector<1x256xf32>
    tpu.vector_store %arg7[%c0_10, %c0_11], %10 {strides = array<i32>} : memref<1x256xf32, #tpu.memory_space<vmem>>, vector<1x256xf32>,
    %c0_i32_12 = arith.constant 0 : i32
    %12 = arith.cmpi eq, %arg1, %c0_i32_12 : i32
    %13 = arith.extui %12 : i1 to i32
    %c0_i32_13 = arith.constant 0 : i32
    %14 = arith.cmpi ne, %13, %c0_i32_13 : i32
    scf.if %14 {
      %c0_14 = arith.constant 0 : index
      %c0_15 = arith.constant 0 : index
      %15 = vector.load %arg6[%c0_14, %c0_15] : memref<1x256xf32, #tpu.memory_space<vmem>>, vector<1x256xf32>
      %c0_16 = arith.constant 0 : index
      %c0_17 = arith.constant 0 : index
      %16 = vector.load %arg7[%c0_16, %c0_17] : memref<1x256xf32, #tpu.memory_space<vmem>>, vector<1x256xf32>
      %cst_18 = arith.constant 2.500000e-01 : f32
      %17 = vector.broadcast %cst_18 : f32 to vector<1x256xf32>
      %18 = arith.mulf %16, %17 : vector<1x256xf32>
      %19 = tpu.concatenate %15, %18 in 0 : vector<1x256xf32>, vector<1x256xf32> -> vector<2x256xf32>
      %20 = tpu.iota {dimensions = array<i32: 1>} : vector<1x256xi32>
      %c15_i32 = arith.constant 15 : i32
      %21 = vector.broadcast %c15_i32 : i32 to vector<1x256xi32>
      %22 = arith.andi %20, %21 : vector<1x256xi32>
      %c4_i32 = arith.constant 4 : i32
      %23 = vector.broadcast %c4_i32 : i32 to vector<1x256xi32>
      %24 = arith.shrsi %20, %23 : vector<1x256xi32>
      %c-3_i32 = arith.constant -3 : i32
      %25 = vector.broadcast %c-3_i32 : i32 to vector<1x256xi32>
      %26 = arith.addi %22, %25 : vector<1x256xi32>
      %c0_i32_19 = arith.constant 0 : i32
      %27 = vector.broadcast %c0_i32_19 : i32 to vector<1x256xi32>
      %28 = arith.cmpi sge, %26, %27 : vector<1x256xi32>
      %c-3_i32_20 = arith.constant -3 : i32
      %29 = vector.broadcast %c-3_i32_20 : i32 to vector<1x256xi32>
      %30 = arith.addi %22, %29 : vector<1x256xi32>
      %c16_i32 = arith.constant 16 : i32
      %31 = vector.broadcast %c16_i32 : i32 to vector<1x256xi32>
      %32 = arith.cmpi slt, %30, %31 : vector<1x256xi32>
      %33 = arith.andi %28, %32 : vector<1x256xi1>
      %c-2_i32 = arith.constant -2 : i32
      %34 = vector.broadcast %c-2_i32 : i32 to vector<1x256xi32>
      %35 = arith.addi %22, %34 : vector<1x256xi32>
      %c0_i32_21 = arith.constant 0 : i32
      %36 = vector.broadcast %c0_i32_21 : i32 to vector<1x256xi32>
      %37 = arith.cmpi sge, %35, %36 : vector<1x256xi32>
      %c-2_i32_22 = arith.constant -2 : i32
      %38 = vector.broadcast %c-2_i32_22 : i32 to vector<1x256xi32>
      %39 = arith.addi %22, %38 : vector<1x256xi32>
      %c16_i32_23 = arith.constant 16 : i32
      %40 = vector.broadcast %c16_i32_23 : i32 to vector<1x256xi32>
      %41 = arith.cmpi slt, %39, %40 : vector<1x256xi32>
      %42 = arith.andi %37, %41 : vector<1x256xi1>
      %c-1_i32 = arith.constant -1 : i32
      %43 = vector.broadcast %c-1_i32 : i32 to vector<1x256xi32>
      %44 = arith.addi %22, %43 : vector<1x256xi32>
      %c0_i32_24 = arith.constant 0 : i32
      %45 = vector.broadcast %c0_i32_24 : i32 to vector<1x256xi32>
      %46 = arith.cmpi sge, %44, %45 : vector<1x256xi32>
      %c-1_i32_25 = arith.constant -1 : i32
      %47 = vector.broadcast %c-1_i32_25 : i32 to vector<1x256xi32>
      %48 = arith.addi %22, %47 : vector<1x256xi32>
      %c16_i32_26 = arith.constant 16 : i32
      %49 = vector.broadcast %c16_i32_26 : i32 to vector<1x256xi32>
      %50 = arith.cmpi slt, %48, %49 : vector<1x256xi32>
      %51 = arith.andi %46, %50 : vector<1x256xi1>
      %c0_i32_27 = arith.constant 0 : i32
      %52 = vector.broadcast %c0_i32_27 : i32 to vector<1x256xi32>
      %53 = arith.addi %22, %52 : vector<1x256xi32>
      %c0_i32_28 = arith.constant 0 : i32
      %54 = vector.broadcast %c0_i32_28 : i32 to vector<1x256xi32>
      %55 = arith.cmpi sge, %53, %54 : vector<1x256xi32>
      %c0_i32_29 = arith.constant 0 : i32
      %56 = vector.broadcast %c0_i32_29 : i32 to vector<1x256xi32>
      %57 = arith.addi %22, %56 : vector<1x256xi32>
      %c16_i32_30 = arith.constant 16 : i32
      %58 = vector.broadcast %c16_i32_30 : i32 to vector<1x256xi32>
      %59 = arith.cmpi slt, %57, %58 : vector<1x256xi32>
      %60 = arith.andi %55, %59 : vector<1x256xi1>
      %c1_i32 = arith.constant 1 : i32
      %61 = vector.broadcast %c1_i32 : i32 to vector<1x256xi32>
      %62 = arith.addi %22, %61 : vector<1x256xi32>
      %c0_i32_31 = arith.constant 0 : i32
      %63 = vector.broadcast %c0_i32_31 : i32 to vector<1x256xi32>
      %64 = arith.cmpi sge, %62, %63 : vector<1x256xi32>
      %c1_i32_32 = arith.constant 1 : i32
      %65 = vector.broadcast %c1_i32_32 : i32 to vector<1x256xi32>
      %66 = arith.addi %22, %65 : vector<1x256xi32>
      %c16_i32_33 = arith.constant 16 : i32
      %67 = vector.broadcast %c16_i32_33 : i32 to vector<1x256xi32>
      %68 = arith.cmpi slt, %66, %67 : vector<1x256xi32>
      %69 = arith.andi %64, %68 : vector<1x256xi1>
      %c2_i32 = arith.constant 2 : i32
      %70 = vector.broadcast %c2_i32 : i32 to vector<1x256xi32>
      %71 = arith.addi %22, %70 : vector<1x256xi32>
      %c0_i32_34 = arith.constant 0 : i32
      %72 = vector.broadcast %c0_i32_34 : i32 to vector<1x256xi32>
      %73 = arith.cmpi sge, %71, %72 : vector<1x256xi32>
      %c2_i32_35 = arith.constant 2 : i32
      %74 = vector.broadcast %c2_i32_35 : i32 to vector<1x256xi32>
      %75 = arith.addi %22, %74 : vector<1x256xi32>
      %c16_i32_36 = arith.constant 16 : i32
      %76 = vector.broadcast %c16_i32_36 : i32 to vector<1x256xi32>
      %77 = arith.cmpi slt, %75, %76 : vector<1x256xi32>
      %78 = arith.andi %73, %77 : vector<1x256xi1>
      %c3_i32 = arith.constant 3 : i32
      %79 = vector.broadcast %c3_i32 : i32 to vector<1x256xi32>
      %80 = arith.addi %22, %79 : vector<1x256xi32>
      %c0_i32_37 = arith.constant 0 : i32
      %81 = vector.broadcast %c0_i32_37 : i32 to vector<1x256xi32>
      %82 = arith.cmpi sge, %80, %81 : vector<1x256xi32>
      %c3_i32_38 = arith.constant 3 : i32
      %83 = vector.broadcast %c3_i32_38 : i32 to vector<1x256xi32>
      %84 = arith.addi %22, %83 : vector<1x256xi32>
      %c16_i32_39 = arith.constant 16 : i32
      %85 = vector.broadcast %c16_i32_39 : i32 to vector<1x256xi32>
      %86 = arith.cmpi slt, %84, %85 : vector<1x256xi32>
      %87 = arith.andi %82, %86 : vector<1x256xi1>
      %c-3_i32_40 = arith.constant -3 : i32
      %88 = vector.broadcast %c-3_i32_40 : i32 to vector<1x256xi32>
      %89 = arith.addi %24, %88 : vector<1x256xi32>
      %c0_i32_41 = arith.constant 0 : i32
      %90 = vector.broadcast %c0_i32_41 : i32 to vector<1x256xi32>
      %91 = arith.cmpi sge, %89, %90 : vector<1x256xi32>
      %c-3_i32_42 = arith.constant -3 : i32
      %92 = vector.broadcast %c-3_i32_42 : i32 to vector<1x256xi32>
      %93 = arith.addi %24, %92 : vector<1x256xi32>
      %c16_i32_43 = arith.constant 16 : i32
      %94 = vector.broadcast %c16_i32_43 : i32 to vector<1x256xi32>
      %95 = arith.cmpi slt, %93, %94 : vector<1x256xi32>
      %96 = arith.andi %91, %95 : vector<1x256xi1>
      %c-2_i32_44 = arith.constant -2 : i32
      %97 = vector.broadcast %c-2_i32_44 : i32 to vector<1x256xi32>
      %98 = arith.addi %24, %97 : vector<1x256xi32>
      %c0_i32_45 = arith.constant 0 : i32
      %99 = vector.broadcast %c0_i32_45 : i32 to vector<1x256xi32>
      %100 = arith.cmpi sge, %98, %99 : vector<1x256xi32>
      %c-2_i32_46 = arith.constant -2 : i32
      %101 = vector.broadcast %c-2_i32_46 : i32 to vector<1x256xi32>
      %102 = arith.addi %24, %101 : vector<1x256xi32>
      %c16_i32_47 = arith.constant 16 : i32
      %103 = vector.broadcast %c16_i32_47 : i32 to vector<1x256xi32>
      %104 = arith.cmpi slt, %102, %103 : vector<1x256xi32>
      %105 = arith.andi %100, %104 : vector<1x256xi1>
      %c-1_i32_48 = arith.constant -1 : i32
      %106 = vector.broadcast %c-1_i32_48 : i32 to vector<1x256xi32>
      %107 = arith.addi %24, %106 : vector<1x256xi32>
      %c0_i32_49 = arith.constant 0 : i32
      %108 = vector.broadcast %c0_i32_49 : i32 to vector<1x256xi32>
      %109 = arith.cmpi sge, %107, %108 : vector<1x256xi32>
      %c-1_i32_50 = arith.constant -1 : i32
      %110 = vector.broadcast %c-1_i32_50 : i32 to vector<1x256xi32>
      %111 = arith.addi %24, %110 : vector<1x256xi32>
      %c16_i32_51 = arith.constant 16 : i32
      %112 = vector.broadcast %c16_i32_51 : i32 to vector<1x256xi32>
      %113 = arith.cmpi slt, %111, %112 : vector<1x256xi32>
      %114 = arith.andi %109, %113 : vector<1x256xi1>
      %c0_i32_52 = arith.constant 0 : i32
      %115 = vector.broadcast %c0_i32_52 : i32 to vector<1x256xi32>
      %116 = arith.addi %24, %115 : vector<1x256xi32>
      %c0_i32_53 = arith.constant 0 : i32
      %117 = vector.broadcast %c0_i32_53 : i32 to vector<1x256xi32>
      %118 = arith.cmpi sge, %116, %117 : vector<1x256xi32>
      %c0_i32_54 = arith.constant 0 : i32
      %119 = vector.broadcast %c0_i32_54 : i32 to vector<1x256xi32>
      %120 = arith.addi %24, %119 : vector<1x256xi32>
      %c16_i32_55 = arith.constant 16 : i32
      %121 = vector.broadcast %c16_i32_55 : i32 to vector<1x256xi32>
      %122 = arith.cmpi slt, %120, %121 : vector<1x256xi32>
      %123 = arith.andi %118, %122 : vector<1x256xi1>
      %c1_i32_56 = arith.constant 1 : i32
      %124 = vector.broadcast %c1_i32_56 : i32 to vector<1x256xi32>
      %125 = arith.addi %24, %124 : vector<1x256xi32>
      %c0_i32_57 = arith.constant 0 : i32
      %126 = vector.broadcast %c0_i32_57 : i32 to vector<1x256xi32>
      %127 = arith.cmpi sge, %125, %126 : vector<1x256xi32>
      %c1_i32_58 = arith.constant 1 : i32
      %128 = vector.broadcast %c1_i32_58 : i32 to vector<1x256xi32>
      %129 = arith.addi %24, %128 : vector<1x256xi32>
      %c16_i32_59 = arith.constant 16 : i32
      %130 = vector.broadcast %c16_i32_59 : i32 to vector<1x256xi32>
      %131 = arith.cmpi slt, %129, %130 : vector<1x256xi32>
      %132 = arith.andi %127, %131 : vector<1x256xi1>
      %c2_i32_60 = arith.constant 2 : i32
      %133 = vector.broadcast %c2_i32_60 : i32 to vector<1x256xi32>
      %134 = arith.addi %24, %133 : vector<1x256xi32>
      %c0_i32_61 = arith.constant 0 : i32
      %135 = vector.broadcast %c0_i32_61 : i32 to vector<1x256xi32>
      %136 = arith.cmpi sge, %134, %135 : vector<1x256xi32>
      %c2_i32_62 = arith.constant 2 : i32
      %137 = vector.broadcast %c2_i32_62 : i32 to vector<1x256xi32>
      %138 = arith.addi %24, %137 : vector<1x256xi32>
      %c16_i32_63 = arith.constant 16 : i32
      %139 = vector.broadcast %c16_i32_63 : i32 to vector<1x256xi32>
      %140 = arith.cmpi slt, %138, %139 : vector<1x256xi32>
      %141 = arith.andi %136, %140 : vector<1x256xi1>
      %c3_i32_64 = arith.constant 3 : i32
      %142 = vector.broadcast %c3_i32_64 : i32 to vector<1x256xi32>
      %143 = arith.addi %24, %142 : vector<1x256xi32>
      %c0_i32_65 = arith.constant 0 : i32
      %144 = vector.broadcast %c0_i32_65 : i32 to vector<1x256xi32>
      %145 = arith.cmpi sge, %143, %144 : vector<1x256xi32>
      %c3_i32_66 = arith.constant 3 : i32
      %146 = vector.broadcast %c3_i32_66 : i32 to vector<1x256xi32>
      %147 = arith.addi %24, %146 : vector<1x256xi32>
      %c16_i32_67 = arith.constant 16 : i32
      %148 = vector.broadcast %c16_i32_67 : i32 to vector<1x256xi32>
      %149 = arith.cmpi slt, %147, %148 : vector<1x256xi32>
      %150 = arith.andi %145, %149 : vector<1x256xi1>
      %151 = tpu.iota {dimensions = array<i32: 0>} : vector<2x1xi32>
      %c1_i32_68 = arith.constant 1 : i32
      %152 = vector.broadcast %c1_i32_68 : i32 to vector<2x1xi32>
      %153 = arith.cmpi slt, %151, %152 : vector<2x1xi32>
      %c0_69 = arith.constant 0 : index
      %154 = memref.load %arg4[%c0_69] : memref<1xf32, #tpu.memory_space<smem>>
      %c3_i32_70 = arith.constant 3 : i32
      %155 = tpu.dynamic_rotate %19 by %c3_i32_70 dim 1 : vector<2x256xf32>, i32 -> vector<2x256xf32>
      %cst_71 = arith.constant 0.000000e+00 : f32
      %156 = vector.shape_cast %33 : vector<1x256xi1> to vector<1x256xi1>
      %157 = vector.broadcast %156 : vector<1x256xi1> to vector<2x256xi1>
      %158 = vector.broadcast %cst_71 : f32 to vector<2x256xf32>
      %159 = arith.select %157, %155, %158 : vector<2x256xi1>, vector<2x256xf32>
      %c2_i32_72 = arith.constant 2 : i32
      %160 = tpu.dynamic_rotate %19 by %c2_i32_72 dim 1 : vector<2x256xf32>, i32 -> vector<2x256xf32>
      %cst_73 = arith.constant 0.000000e+00 : f32
      %161 = vector.shape_cast %42 : vector<1x256xi1> to vector<1x256xi1>
      %162 = vector.broadcast %161 : vector<1x256xi1> to vector<2x256xi1>
      %163 = vector.broadcast %cst_73 : f32 to vector<2x256xf32>
      %164 = arith.select %162, %160, %163 : vector<2x256xi1>, vector<2x256xf32>
      %c1_i32_74 = arith.constant 1 : i32
      %165 = tpu.dynamic_rotate %19 by %c1_i32_74 dim 1 : vector<2x256xf32>, i32 -> vector<2x256xf32>
      %cst_75 = arith.constant 0.000000e+00 : f32
      %166 = vector.shape_cast %51 : vector<1x256xi1> to vector<1x256xi1>
      %167 = vector.broadcast %166 : vector<1x256xi1> to vector<2x256xi1>
      %168 = vector.broadcast %cst_75 : f32 to vector<2x256xf32>
      %169 = arith.select %167, %165, %168 : vector<2x256xi1>, vector<2x256xf32>
      %cst_76 = arith.constant 0.000000e+00 : f32
      %170 = vector.shape_cast %60 : vector<1x256xi1> to vector<1x256xi1>
      %171 = vector.broadcast %170 : vector<1x256xi1> to vector<2x256xi1>
      %172 = vector.broadcast %cst_76 : f32 to vector<2x256xf32>
      %173 = arith.select %171, %19, %172 : vector<2x256xi1>, vector<2x256xf32>
      %c255_i32 = arith.constant 255 : i32
      %174 = tpu.dynamic_rotate %19 by %c255_i32 dim 1 : vector<2x256xf32>, i32 -> vector<2x256xf32>
      %cst_77 = arith.constant 0.000000e+00 : f32
      %175 = vector.shape_cast %69 : vector<1x256xi1> to vector<1x256xi1>
      %176 = vector.broadcast %175 : vector<1x256xi1> to vector<2x256xi1>
      %177 = vector.broadcast %cst_77 : f32 to vector<2x256xf32>
      %178 = arith.select %176, %174, %177 : vector<2x256xi1>, vector<2x256xf32>
      %c254_i32 = arith.constant 254 : i32
      %179 = tpu.dynamic_rotate %19 by %c254_i32 dim 1 : vector<2x256xf32>, i32 -> vector<2x256xf32>
      %cst_78 = arith.constant 0.000000e+00 : f32
      %180 = vector.shape_cast %78 : vector<1x256xi1> to vector<1x256xi1>
      %181 = vector.broadcast %180 : vector<1x256xi1> to vector<2x256xi1>
      %182 = vector.broadcast %cst_78 : f32 to vector<2x256xf32>
      %183 = arith.select %181, %179, %182 : vector<2x256xi1>, vector<2x256xf32>
      %c253_i32 = arith.constant 253 : i32
      %184 = tpu.dynamic_rotate %19 by %c253_i32 dim 1 : vector<2x256xf32>, i32 -> vector<2x256xf32>
      %cst_79 = arith.constant 0.000000e+00 : f32
      %185 = vector.shape_cast %87 : vector<1x256xi1> to vector<1x256xi1>
      %186 = vector.broadcast %185 : vector<1x256xi1> to vector<2x256xi1>
      %187 = vector.broadcast %cst_79 : f32 to vector<2x256xf32>
      %188 = arith.select %186, %184, %187 : vector<2x256xi1>, vector<2x256xf32>
      %cst_80 = arith.constant 0.000000e+00 : f32
      %189 = vector.broadcast %cst_80 : f32 to vector<2x256xf32>
      %cst_81 = arith.constant 0.000000e+00 : f32
      %190 = vector.broadcast %cst_81 : f32 to vector<2x256xf32>
      %c0_82 = arith.constant 0 : index
      %191 = memref.load %arg3[%c0_82] : memref<98xf32, #tpu.memory_space<smem>>
      %c49 = arith.constant 49 : index
      %192 = memref.load %arg3[%c49] : memref<98xf32, #tpu.memory_space<smem>>
      %193 = vector.broadcast %191 : f32 to vector<2x1xf32>
      %194 = vector.broadcast %192 : f32 to vector<2x1xf32>
      %195 = arith.select %153, %193, %194 : vector<2x1xi1>, vector<2x1xf32>
      %196 = vector.broadcast %195 : vector<2x1xf32> to vector<2x256xf32>
      %197 = arith.mulf %196, %159 : vector<2x256xf32>
      %198 = arith.addf %190, %197 : vector<2x256xf32>
      %c1 = arith.constant 1 : index
      %199 = memref.load %arg3[%c1] : memref<98xf32, #tpu.memory_space<smem>>
      %c50 = arith.constant 50 : index
      %200 = memref.load %arg3[%c50] : memref<98xf32, #tpu.memory_space<smem>>
      %201 = vector.broadcast %199 : f32 to vector<2x1xf32>
      %202 = vector.broadcast %200 : f32 to vector<2x1xf32>
      %203 = arith.select %153, %201, %202 : vector<2x1xi1>, vector<2x1xf32>
      %204 = vector.broadcast %203 : vector<2x1xf32> to vector<2x256xf32>
      %205 = arith.mulf %204, %164 : vector<2x256xf32>
      %206 = arith.addf %198, %205 : vector<2x256xf32>
      %c2 = arith.constant 2 : index
      %207 = memref.load %arg3[%c2] : memref<98xf32, #tpu.memory_space<smem>>
      %c51 = arith.constant 51 : index
      %208 = memref.load %arg3[%c51] : memref<98xf32, #tpu.memory_space<smem>>
      %209 = vector.broadcast %207 : f32 to vector<2x1xf32>
      %210 = vector.broadcast %208 : f32 to vector<2x1xf32>
      %211 = arith.select %153, %209, %210 : vector<2x1xi1>, vector<2x1xf32>
      %212 = vector.broadcast %211 : vector<2x1xf32> to vector<2x256xf32>
      %213 = arith.mulf %212, %169 : vector<2x256xf32>
      %214 = arith.addf %206, %213 : vector<2x256xf32>
      %c3 = arith.constant 3 : index
      %215 = memref.load %arg3[%c3] : memref<98xf32, #tpu.memory_space<smem>>
      %c52 = arith.constant 52 : index
      %216 = memref.load %arg3[%c52] : memref<98xf32, #tpu.memory_space<smem>>
      %217 = vector.broadcast %215 : f32 to vector<2x1xf32>
      %218 = vector.broadcast %216 : f32 to vector<2x1xf32>
      %219 = arith.select %153, %217, %218 : vector<2x1xi1>, vector<2x1xf32>
      %220 = vector.broadcast %219 : vector<2x1xf32> to vector<2x256xf32>
      %221 = arith.mulf %220, %173 : vector<2x256xf32>
      %222 = arith.addf %214, %221 : vector<2x256xf32>
      %c4 = arith.constant 4 : index
      %223 = memref.load %arg3[%c4] : memref<98xf32, #tpu.memory_space<smem>>
      %c53 = arith.constant 53 : index
      %224 = memref.load %arg3[%c53] : memref<98xf32, #tpu.memory_space<smem>>
      %225 = vector.broadcast %223 : f32 to vector<2x1xf32>
      %226 = vector.broadcast %224 : f32 to vector<2x1xf32>
      %227 = arith.select %153, %225, %226 : vector<2x1xi1>, vector<2x1xf32>
      %228 = vector.broadcast %227 : vector<2x1xf32> to vector<2x256xf32>
      %229 = arith.mulf %228, %178 : vector<2x256xf32>
      %230 = arith.addf %222, %229 : vector<2x256xf32>
      %c5 = arith.constant 5 : index
      %231 = memref.load %arg3[%c5] : memref<98xf32, #tpu.memory_space<smem>>
      %c54 = arith.constant 54 : index
      %232 = memref.load %arg3[%c54] : memref<98xf32, #tpu.memory_space<smem>>
      %233 = vector.broadcast %231 : f32 to vector<2x1xf32>
      %234 = vector.broadcast %232 : f32 to vector<2x1xf32>
      %235 = arith.select %153, %233, %234 : vector<2x1xi1>, vector<2x1xf32>
      %236 = vector.broadcast %235 : vector<2x1xf32> to vector<2x256xf32>
      %237 = arith.mulf %236, %183 : vector<2x256xf32>
      %238 = arith.addf %230, %237 : vector<2x256xf32>
      %c6 = arith.constant 6 : index
      %239 = memref.load %arg3[%c6] : memref<98xf32, #tpu.memory_space<smem>>
      %c55 = arith.constant 55 : index
      %240 = memref.load %arg3[%c55] : memref<98xf32, #tpu.memory_space<smem>>
      %241 = vector.broadcast %239 : f32 to vector<2x1xf32>
      %242 = vector.broadcast %240 : f32 to vector<2x1xf32>
      %243 = arith.select %153, %241, %242 : vector<2x1xi1>, vector<2x1xf32>
      %244 = vector.broadcast %243 : vector<2x1xf32> to vector<2x256xf32>
      %245 = arith.mulf %244, %188 : vector<2x256xf32>
      %246 = arith.addf %238, %245 : vector<2x256xf32>
      %c48_i32 = arith.constant 48 : i32
      %247 = tpu.dynamic_rotate %246 by %c48_i32 dim 1 : vector<2x256xf32>, i32 -> vector<2x256xf32>
      %cst_83 = arith.constant 0.000000e+00 : f32
      %248 = vector.shape_cast %96 : vector<1x256xi1> to vector<1x256xi1>
      %249 = vector.broadcast %248 : vector<1x256xi1> to vector<2x256xi1>
      %250 = vector.broadcast %cst_83 : f32 to vector<2x256xf32>
      %251 = arith.select %249, %247, %250 : vector<2x256xi1>, vector<2x256xf32>
      %252 = arith.addf %189, %251 : vector<2x256xf32>
      %cst_84 = arith.constant 0.000000e+00 : f32
      %253 = vector.broadcast %cst_84 : f32 to vector<2x256xf32>
      %c7 = arith.constant 7 : index
      %254 = memref.load %arg3[%c7] : memref<98xf32, #tpu.memory_space<smem>>
      %c56 = arith.constant 56 : index
      %255 = memref.load %arg3[%c56] : memref<98xf32, #tpu.memory_space<smem>>
      %256 = vector.broadcast %254 : f32 to vector<2x1xf32>
      %257 = vector.broadcast %255 : f32 to vector<2x1xf32>
      %258 = arith.select %153, %256, %257 : vector<2x1xi1>, vector<2x1xf32>
      %259 = vector.broadcast %258 : vector<2x1xf32> to vector<2x256xf32>
      %260 = arith.mulf %259, %159 : vector<2x256xf32>
      %261 = arith.addf %253, %260 : vector<2x256xf32>
      %c8 = arith.constant 8 : index
      %262 = memref.load %arg3[%c8] : memref<98xf32, #tpu.memory_space<smem>>
      %c57 = arith.constant 57 : index
      %263 = memref.load %arg3[%c57] : memref<98xf32, #tpu.memory_space<smem>>
      %264 = vector.broadcast %262 : f32 to vector<2x1xf32>
      %265 = vector.broadcast %263 : f32 to vector<2x1xf32>
      %266 = arith.select %153, %264, %265 : vector<2x1xi1>, vector<2x1xf32>
      %267 = vector.broadcast %266 : vector<2x1xf32> to vector<2x256xf32>
      %268 = arith.mulf %267, %164 : vector<2x256xf32>
      %269 = arith.addf %261, %268 : vector<2x256xf32>
      %c9 = arith.constant 9 : index
      %270 = memref.load %arg3[%c9] : memref<98xf32, #tpu.memory_space<smem>>
      %c58 = arith.constant 58 : index
      %271 = memref.load %arg3[%c58] : memref<98xf32, #tpu.memory_space<smem>>
      %272 = vector.broadcast %270 : f32 to vector<2x1xf32>
      %273 = vector.broadcast %271 : f32 to vector<2x1xf32>
      %274 = arith.select %153, %272, %273 : vector<2x1xi1>, vector<2x1xf32>
      %275 = vector.broadcast %274 : vector<2x1xf32> to vector<2x256xf32>
      %276 = arith.mulf %275, %169 : vector<2x256xf32>
      %277 = arith.addf %269, %276 : vector<2x256xf32>
      %c10 = arith.constant 10 : index
      %278 = memref.load %arg3[%c10] : memref<98xf32, #tpu.memory_space<smem>>
      %c59 = arith.constant 59 : index
      %279 = memref.load %arg3[%c59] : memref<98xf32, #tpu.memory_space<smem>>
      %280 = vector.broadcast %278 : f32 to vector<2x1xf32>
      %281 = vector.broadcast %279 : f32 to vector<2x1xf32>
      %282 = arith.select %153, %280, %281 : vector<2x1xi1>, vector<2x1xf32>
      %283 = vector.broadcast %282 : vector<2x1xf32> to vector<2x256xf32>
      %284 = arith.mulf %283, %173 : vector<2x256xf32>
      %285 = arith.addf %277, %284 : vector<2x256xf32>
      %c11 = arith.constant 11 : index
      %286 = memref.load %arg3[%c11] : memref<98xf32, #tpu.memory_space<smem>>
      %c60 = arith.constant 60 : index
      %287 = memref.load %arg3[%c60] : memref<98xf32, #tpu.memory_space<smem>>
      %288 = vector.broadcast %286 : f32 to vector<2x1xf32>
      %289 = vector.broadcast %287 : f32 to vector<2x1xf32>
      %290 = arith.select %153, %288, %289 : vector<2x1xi1>, vector<2x1xf32>
      %291 = vector.broadcast %290 : vector<2x1xf32> to vector<2x256xf32>
      %292 = arith.mulf %291, %178 : vector<2x256xf32>
      %293 = arith.addf %285, %292 : vector<2x256xf32>
      %c12 = arith.constant 12 : index
      %294 = memref.load %arg3[%c12] : memref<98xf32, #tpu.memory_space<smem>>
      %c61 = arith.constant 61 : index
      %295 = memref.load %arg3[%c61] : memref<98xf32, #tpu.memory_space<smem>>
      %296 = vector.broadcast %294 : f32 to vector<2x1xf32>
      %297 = vector.broadcast %295 : f32 to vector<2x1xf32>
      %298 = arith.select %153, %296, %297 : vector<2x1xi1>, vector<2x1xf32>
      %299 = vector.broadcast %298 : vector<2x1xf32> to vector<2x256xf32>
      %300 = arith.mulf %299, %183 : vector<2x256xf32>
      %301 = arith.addf %293, %300 : vector<2x256xf32>
      %c13 = arith.constant 13 : index
      %302 = memref.load %arg3[%c13] : memref<98xf32, #tpu.memory_space<smem>>
      %c62 = arith.constant 62 : index
      %303 = memref.load %arg3[%c62] : memref<98xf32, #tpu.memory_space<smem>>
      %304 = vector.broadcast %302 : f32 to vector<2x1xf32>
      %305 = vector.broadcast %303 : f32 to vector<2x1xf32>
      %306 = arith.select %153, %304, %305 : vector<2x1xi1>, vector<2x1xf32>
      %307 = vector.broadcast %306 : vector<2x1xf32> to vector<2x256xf32>
      %308 = arith.mulf %307, %188 : vector<2x256xf32>
      %309 = arith.addf %301, %308 : vector<2x256xf32>
      %c32_i32 = arith.constant 32 : i32
      %310 = tpu.dynamic_rotate %309 by %c32_i32 dim 1 : vector<2x256xf32>, i32 -> vector<2x256xf32>
      %cst_85 = arith.constant 0.000000e+00 : f32
      %311 = vector.shape_cast %105 : vector<1x256xi1> to vector<1x256xi1>
      %312 = vector.broadcast %311 : vector<1x256xi1> to vector<2x256xi1>
      %313 = vector.broadcast %cst_85 : f32 to vector<2x256xf32>
      %314 = arith.select %312, %310, %313 : vector<2x256xi1>, vector<2x256xf32>
      %315 = arith.addf %252, %314 : vector<2x256xf32>
      %cst_86 = arith.constant 0.000000e+00 : f32
      %316 = vector.broadcast %cst_86 : f32 to vector<2x256xf32>
      %c14 = arith.constant 14 : index
      %317 = memref.load %arg3[%c14] : memref<98xf32, #tpu.memory_space<smem>>
      %c63 = arith.constant 63 : index
      %318 = memref.load %arg3[%c63] : memref<98xf32, #tpu.memory_space<smem>>
      %319 = vector.broadcast %317 : f32 to vector<2x1xf32>
      %320 = vector.broadcast %318 : f32 to vector<2x1xf32>
      %321 = arith.select %153, %319, %320 : vector<2x1xi1>, vector<2x1xf32>
      %322 = vector.broadcast %321 : vector<2x1xf32> to vector<2x256xf32>
      %323 = arith.mulf %322, %159 : vector<2x256xf32>
      %324 = arith.addf %316, %323 : vector<2x256xf32>
      %c15 = arith.constant 15 : index
      %325 = memref.load %arg3[%c15] : memref<98xf32, #tpu.memory_space<smem>>
      %c64 = arith.constant 64 : index
      %326 = memref.load %arg3[%c64] : memref<98xf32, #tpu.memory_space<smem>>
      %327 = vector.broadcast %325 : f32 to vector<2x1xf32>
      %328 = vector.broadcast %326 : f32 to vector<2x1xf32>
      %329 = arith.select %153, %327, %328 : vector<2x1xi1>, vector<2x1xf32>
      %330 = vector.broadcast %329 : vector<2x1xf32> to vector<2x256xf32>
      %331 = arith.mulf %330, %164 : vector<2x256xf32>
      %332 = arith.addf %324, %331 : vector<2x256xf32>
      %c16 = arith.constant 16 : index
      %333 = memref.load %arg3[%c16] : memref<98xf32, #tpu.memory_space<smem>>
      %c65 = arith.constant 65 : index
      %334 = memref.load %arg3[%c65] : memref<98xf32, #tpu.memory_space<smem>>
      %335 = vector.broadcast %333 : f32 to vector<2x1xf32>
      %336 = vector.broadcast %334 : f32 to vector<2x1xf32>
      %337 = arith.select %153, %335, %336 : vector<2x1xi1>, vector<2x1xf32>
      %338 = vector.broadcast %337 : vector<2x1xf32> to vector<2x256xf32>
      %339 = arith.mulf %338, %169 : vector<2x256xf32>
      %340 = arith.addf %332, %339 : vector<2x256xf32>
      %c17 = arith.constant 17 : index
      %341 = memref.load %arg3[%c17] : memref<98xf32, #tpu.memory_space<smem>>
      %c66 = arith.constant 66 : index
      %342 = memref.load %arg3[%c66] : memref<98xf32, #tpu.memory_space<smem>>
      %343 = vector.broadcast %341 : f32 to vector<2x1xf32>
      %344 = vector.broadcast %342 : f32 to vector<2x1xf32>
      %345 = arith.select %153, %343, %344 : vector<2x1xi1>, vector<2x1xf32>
      %346 = vector.broadcast %345 : vector<2x1xf32> to vector<2x256xf32>
      %347 = arith.mulf %346, %173 : vector<2x256xf32>
      %348 = arith.addf %340, %347 : vector<2x256xf32>
      %c18 = arith.constant 18 : index
      %349 = memref.load %arg3[%c18] : memref<98xf32, #tpu.memory_space<smem>>
      %c67 = arith.constant 67 : index
      %350 = memref.load %arg3[%c67] : memref<98xf32, #tpu.memory_space<smem>>
      %351 = vector.broadcast %349 : f32 to vector<2x1xf32>
      %352 = vector.broadcast %350 : f32 to vector<2x1xf32>
      %353 = arith.select %153, %351, %352 : vector<2x1xi1>, vector<2x1xf32>
      %354 = vector.broadcast %353 : vector<2x1xf32> to vector<2x256xf32>
      %355 = arith.mulf %354, %178 : vector<2x256xf32>
      %356 = arith.addf %348, %355 : vector<2x256xf32>
      %c19 = arith.constant 19 : index
      %357 = memref.load %arg3[%c19] : memref<98xf32, #tpu.memory_space<smem>>
      %c68 = arith.constant 68 : index
      %358 = memref.load %arg3[%c68] : memref<98xf32, #tpu.memory_space<smem>>
      %359 = vector.broadcast %357 : f32 to vector<2x1xf32>
      %360 = vector.broadcast %358 : f32 to vector<2x1xf32>
      %361 = arith.select %153, %359, %360 : vector<2x1xi1>, vector<2x1xf32>
      %362 = vector.broadcast %361 : vector<2x1xf32> to vector<2x256xf32>
      %363 = arith.mulf %362, %183 : vector<2x256xf32>
      %364 = arith.addf %356, %363 : vector<2x256xf32>
      %c20 = arith.constant 20 : index
      %365 = memref.load %arg3[%c20] : memref<98xf32, #tpu.memory_space<smem>>
      %c69 = arith.constant 69 : index
      %366 = memref.load %arg3[%c69] : memref<98xf32, #tpu.memory_space<smem>>
      %367 = vector.broadcast %365 : f32 to vector<2x1xf32>
      %368 = vector.broadcast %366 : f32 to vector<2x1xf32>
      %369 = arith.select %153, %367, %368 : vector<2x1xi1>, vector<2x1xf32>
      %370 = vector.broadcast %369 : vector<2x1xf32> to vector<2x256xf32>
      %371 = arith.mulf %370, %188 : vector<2x256xf32>
      %372 = arith.addf %364, %371 : vector<2x256xf32>
      %c16_i32_87 = arith.constant 16 : i32
      %373 = tpu.dynamic_rotate %372 by %c16_i32_87 dim 1 : vector<2x256xf32>, i32 -> vector<2x256xf32>
      %cst_88 = arith.constant 0.000000e+00 : f32
      %374 = vector.shape_cast %114 : vector<1x256xi1> to vector<1x256xi1>
      %375 = vector.broadcast %374 : vector<1x256xi1> to vector<2x256xi1>
      %376 = vector.broadcast %cst_88 : f32 to vector<2x256xf32>
      %377 = arith.select %375, %373, %376 : vector<2x256xi1>, vector<2x256xf32>
      %378 = arith.addf %315, %377 : vector<2x256xf32>
      %cst_89 = arith.constant 0.000000e+00 : f32
      %379 = vector.broadcast %cst_89 : f32 to vector<2x256xf32>
      %c21 = arith.constant 21 : index
      %380 = memref.load %arg3[%c21] : memref<98xf32, #tpu.memory_space<smem>>
      %c70 = arith.constant 70 : index
      %381 = memref.load %arg3[%c70] : memref<98xf32, #tpu.memory_space<smem>>
      %382 = vector.broadcast %380 : f32 to vector<2x1xf32>
      %383 = vector.broadcast %381 : f32 to vector<2x1xf32>
      %384 = arith.select %153, %382, %383 : vector<2x1xi1>, vector<2x1xf32>
      %385 = vector.broadcast %384 : vector<2x1xf32> to vector<2x256xf32>
      %386 = arith.mulf %385, %159 : vector<2x256xf32>
      %387 = arith.addf %379, %386 : vector<2x256xf32>
      %c22 = arith.constant 22 : index
      %388 = memref.load %arg3[%c22] : memref<98xf32, #tpu.memory_space<smem>>
      %c71 = arith.constant 71 : index
      %389 = memref.load %arg3[%c71] : memref<98xf32, #tpu.memory_space<smem>>
      %390 = vector.broadcast %388 : f32 to vector<2x1xf32>
      %391 = vector.broadcast %389 : f32 to vector<2x1xf32>
      %392 = arith.select %153, %390, %391 : vector<2x1xi1>, vector<2x1xf32>
      %393 = vector.broadcast %392 : vector<2x1xf32> to vector<2x256xf32>
      %394 = arith.mulf %393, %164 : vector<2x256xf32>
      %395 = arith.addf %387, %394 : vector<2x256xf32>
      %c23 = arith.constant 23 : index
      %396 = memref.load %arg3[%c23] : memref<98xf32, #tpu.memory_space<smem>>
      %c72 = arith.constant 72 : index
      %397 = memref.load %arg3[%c72] : memref<98xf32, #tpu.memory_space<smem>>
      %398 = vector.broadcast %396 : f32 to vector<2x1xf32>
      %399 = vector.broadcast %397 : f32 to vector<2x1xf32>
      %400 = arith.select %153, %398, %399 : vector<2x1xi1>, vector<2x1xf32>
      %401 = vector.broadcast %400 : vector<2x1xf32> to vector<2x256xf32>
      %402 = arith.mulf %401, %169 : vector<2x256xf32>
      %403 = arith.addf %395, %402 : vector<2x256xf32>
      %c24 = arith.constant 24 : index
      %404 = memref.load %arg3[%c24] : memref<98xf32, #tpu.memory_space<smem>>
      %c73 = arith.constant 73 : index
      %405 = memref.load %arg3[%c73] : memref<98xf32, #tpu.memory_space<smem>>
      %406 = vector.broadcast %404 : f32 to vector<2x1xf32>
      %407 = vector.broadcast %405 : f32 to vector<2x1xf32>
      %408 = arith.select %153, %406, %407 : vector<2x1xi1>, vector<2x1xf32>
      %409 = vector.broadcast %408 : vector<2x1xf32> to vector<2x256xf32>
      %410 = arith.mulf %409, %173 : vector<2x256xf32>
      %411 = arith.addf %403, %410 : vector<2x256xf32>
      %c25 = arith.constant 25 : index
      %412 = memref.load %arg3[%c25] : memref<98xf32, #tpu.memory_space<smem>>
      %c74 = arith.constant 74 : index
      %413 = memref.load %arg3[%c74] : memref<98xf32, #tpu.memory_space<smem>>
      %414 = vector.broadcast %412 : f32 to vector<2x1xf32>
      %415 = vector.broadcast %413 : f32 to vector<2x1xf32>
      %416 = arith.select %153, %414, %415 : vector<2x1xi1>, vector<2x1xf32>
      %417 = vector.broadcast %416 : vector<2x1xf32> to vector<2x256xf32>
      %418 = arith.mulf %417, %178 : vector<2x256xf32>
      %419 = arith.addf %411, %418 : vector<2x256xf32>
      %c26 = arith.constant 26 : index
      %420 = memref.load %arg3[%c26] : memref<98xf32, #tpu.memory_space<smem>>
      %c75 = arith.constant 75 : index
      %421 = memref.load %arg3[%c75] : memref<98xf32, #tpu.memory_space<smem>>
      %422 = vector.broadcast %420 : f32 to vector<2x1xf32>
      %423 = vector.broadcast %421 : f32 to vector<2x1xf32>
      %424 = arith.select %153, %422, %423 : vector<2x1xi1>, vector<2x1xf32>
      %425 = vector.broadcast %424 : vector<2x1xf32> to vector<2x256xf32>
      %426 = arith.mulf %425, %183 : vector<2x256xf32>
      %427 = arith.addf %419, %426 : vector<2x256xf32>
      %c27 = arith.constant 27 : index
      %428 = memref.load %arg3[%c27] : memref<98xf32, #tpu.memory_space<smem>>
      %c76 = arith.constant 76 : index
      %429 = memref.load %arg3[%c76] : memref<98xf32, #tpu.memory_space<smem>>
      %430 = vector.broadcast %428 : f32 to vector<2x1xf32>
      %431 = vector.broadcast %429 : f32 to vector<2x1xf32>
      %432 = arith.select %153, %430, %431 : vector<2x1xi1>, vector<2x1xf32>
      %433 = vector.broadcast %432 : vector<2x1xf32> to vector<2x256xf32>
      %434 = arith.mulf %433, %188 : vector<2x256xf32>
      %435 = arith.addf %427, %434 : vector<2x256xf32>
      %cst_90 = arith.constant 0.000000e+00 : f32
      %436 = vector.shape_cast %123 : vector<1x256xi1> to vector<1x256xi1>
      %437 = vector.broadcast %436 : vector<1x256xi1> to vector<2x256xi1>
      %438 = vector.broadcast %cst_90 : f32 to vector<2x256xf32>
      %439 = arith.select %437, %435, %438 : vector<2x256xi1>, vector<2x256xf32>
      %440 = arith.addf %378, %439 : vector<2x256xf32>
      %cst_91 = arith.constant 0.000000e+00 : f32
      %441 = vector.broadcast %cst_91 : f32 to vector<2x256xf32>
      %c28 = arith.constant 28 : index
      %442 = memref.load %arg3[%c28] : memref<98xf32, #tpu.memory_space<smem>>
      %c77 = arith.constant 77 : index
      %443 = memref.load %arg3[%c77] : memref<98xf32, #tpu.memory_space<smem>>
      %444 = vector.broadcast %442 : f32 to vector<2x1xf32>
      %445 = vector.broadcast %443 : f32 to vector<2x1xf32>
      %446 = arith.select %153, %444, %445 : vector<2x1xi1>, vector<2x1xf32>
      %447 = vector.broadcast %446 : vector<2x1xf32> to vector<2x256xf32>
      %448 = arith.mulf %447, %159 : vector<2x256xf32>
      %449 = arith.addf %441, %448 : vector<2x256xf32>
      %c29 = arith.constant 29 : index
      %450 = memref.load %arg3[%c29] : memref<98xf32, #tpu.memory_space<smem>>
      %c78 = arith.constant 78 : index
      %451 = memref.load %arg3[%c78] : memref<98xf32, #tpu.memory_space<smem>>
      %452 = vector.broadcast %450 : f32 to vector<2x1xf32>
      %453 = vector.broadcast %451 : f32 to vector<2x1xf32>
      %454 = arith.select %153, %452, %453 : vector<2x1xi1>, vector<2x1xf32>
      %455 = vector.broadcast %454 : vector<2x1xf32> to vector<2x256xf32>
      %456 = arith.mulf %455, %164 : vector<2x256xf32>
      %457 = arith.addf %449, %456 : vector<2x256xf32>
      %c30 = arith.constant 30 : index
      %458 = memref.load %arg3[%c30] : memref<98xf32, #tpu.memory_space<smem>>
      %c79 = arith.constant 79 : index
      %459 = memref.load %arg3[%c79] : memref<98xf32, #tpu.memory_space<smem>>
      %460 = vector.broadcast %458 : f32 to vector<2x1xf32>
      %461 = vector.broadcast %459 : f32 to vector<2x1xf32>
      %462 = arith.select %153, %460, %461 : vector<2x1xi1>, vector<2x1xf32>
      %463 = vector.broadcast %462 : vector<2x1xf32> to vector<2x256xf32>
      %464 = arith.mulf %463, %169 : vector<2x256xf32>
      %465 = arith.addf %457, %464 : vector<2x256xf32>
      %c31 = arith.constant 31 : index
      %466 = memref.load %arg3[%c31] : memref<98xf32, #tpu.memory_space<smem>>
      %c80 = arith.constant 80 : index
      %467 = memref.load %arg3[%c80] : memref<98xf32, #tpu.memory_space<smem>>
      %468 = vector.broadcast %466 : f32 to vector<2x1xf32>
      %469 = vector.broadcast %467 : f32 to vector<2x1xf32>
      %470 = arith.select %153, %468, %469 : vector<2x1xi1>, vector<2x1xf32>
      %471 = vector.broadcast %470 : vector<2x1xf32> to vector<2x256xf32>
      %472 = arith.mulf %471, %173 : vector<2x256xf32>
      %473 = arith.addf %465, %472 : vector<2x256xf32>
      %c32 = arith.constant 32 : index
      %474 = memref.load %arg3[%c32] : memref<98xf32, #tpu.memory_space<smem>>
      %c81 = arith.constant 81 : index
      %475 = memref.load %arg3[%c81] : memref<98xf32, #tpu.memory_space<smem>>
      %476 = vector.broadcast %474 : f32 to vector<2x1xf32>
      %477 = vector.broadcast %475 : f32 to vector<2x1xf32>
      %478 = arith.select %153, %476, %477 : vector<2x1xi1>, vector<2x1xf32>
      %479 = vector.broadcast %478 : vector<2x1xf32> to vector<2x256xf32>
      %480 = arith.mulf %479, %178 : vector<2x256xf32>
      %481 = arith.addf %473, %480 : vector<2x256xf32>
      %c33 = arith.constant 33 : index
      %482 = memref.load %arg3[%c33] : memref<98xf32, #tpu.memory_space<smem>>
      %c82 = arith.constant 82 : index
      %483 = memref.load %arg3[%c82] : memref<98xf32, #tpu.memory_space<smem>>
      %484 = vector.broadcast %482 : f32 to vector<2x1xf32>
      %485 = vector.broadcast %483 : f32 to vector<2x1xf32>
      %486 = arith.select %153, %484, %485 : vector<2x1xi1>, vector<2x1xf32>
      %487 = vector.broadcast %486 : vector<2x1xf32> to vector<2x256xf32>
      %488 = arith.mulf %487, %183 : vector<2x256xf32>
      %489 = arith.addf %481, %488 : vector<2x256xf32>
      %c34 = arith.constant 34 : index
      %490 = memref.load %arg3[%c34] : memref<98xf32, #tpu.memory_space<smem>>
      %c83 = arith.constant 83 : index
      %491 = memref.load %arg3[%c83] : memref<98xf32, #tpu.memory_space<smem>>
      %492 = vector.broadcast %490 : f32 to vector<2x1xf32>
      %493 = vector.broadcast %491 : f32 to vector<2x1xf32>
      %494 = arith.select %153, %492, %493 : vector<2x1xi1>, vector<2x1xf32>
      %495 = vector.broadcast %494 : vector<2x1xf32> to vector<2x256xf32>
      %496 = arith.mulf %495, %188 : vector<2x256xf32>
      %497 = arith.addf %489, %496 : vector<2x256xf32>
      %c240_i32 = arith.constant 240 : i32
      %498 = tpu.dynamic_rotate %497 by %c240_i32 dim 1 : vector<2x256xf32>, i32 -> vector<2x256xf32>
      %cst_92 = arith.constant 0.000000e+00 : f32
      %499 = vector.shape_cast %132 : vector<1x256xi1> to vector<1x256xi1>
      %500 = vector.broadcast %499 : vector<1x256xi1> to vector<2x256xi1>
      %501 = vector.broadcast %cst_92 : f32 to vector<2x256xf32>
      %502 = arith.select %500, %498, %501 : vector<2x256xi1>, vector<2x256xf32>
      %503 = arith.addf %440, %502 : vector<2x256xf32>
      %cst_93 = arith.constant 0.000000e+00 : f32
      %504 = vector.broadcast %cst_93 : f32 to vector<2x256xf32>
      %c35 = arith.constant 35 : index
      %505 = memref.load %arg3[%c35] : memref<98xf32, #tpu.memory_space<smem>>
      %c84 = arith.constant 84 : index
      %506 = memref.load %arg3[%c84] : memref<98xf32, #tpu.memory_space<smem>>
      %507 = vector.broadcast %505 : f32 to vector<2x1xf32>
      %508 = vector.broadcast %506 : f32 to vector<2x1xf32>
      %509 = arith.select %153, %507, %508 : vector<2x1xi1>, vector<2x1xf32>
      %510 = vector.broadcast %509 : vector<2x1xf32> to vector<2x256xf32>
      %511 = arith.mulf %510, %159 : vector<2x256xf32>
      %512 = arith.addf %504, %511 : vector<2x256xf32>
      %c36 = arith.constant 36 : index
      %513 = memref.load %arg3[%c36] : memref<98xf32, #tpu.memory_space<smem>>
      %c85 = arith.constant 85 : index
      %514 = memref.load %arg3[%c85] : memref<98xf32, #tpu.memory_space<smem>>
      %515 = vector.broadcast %513 : f32 to vector<2x1xf32>
      %516 = vector.broadcast %514 : f32 to vector<2x1xf32>
      %517 = arith.select %153, %515, %516 : vector<2x1xi1>, vector<2x1xf32>
      %518 = vector.broadcast %517 : vector<2x1xf32> to vector<2x256xf32>
      %519 = arith.mulf %518, %164 : vector<2x256xf32>
      %520 = arith.addf %512, %519 : vector<2x256xf32>
      %c37 = arith.constant 37 : index
      %521 = memref.load %arg3[%c37] : memref<98xf32, #tpu.memory_space<smem>>
      %c86 = arith.constant 86 : index
      %522 = memref.load %arg3[%c86] : memref<98xf32, #tpu.memory_space<smem>>
      %523 = vector.broadcast %521 : f32 to vector<2x1xf32>
      %524 = vector.broadcast %522 : f32 to vector<2x1xf32>
      %525 = arith.select %153, %523, %524 : vector<2x1xi1>, vector<2x1xf32>
      %526 = vector.broadcast %525 : vector<2x1xf32> to vector<2x256xf32>
      %527 = arith.mulf %526, %169 : vector<2x256xf32>
      %528 = arith.addf %520, %527 : vector<2x256xf32>
      %c38 = arith.constant 38 : index
      %529 = memref.load %arg3[%c38] : memref<98xf32, #tpu.memory_space<smem>>
      %c87 = arith.constant 87 : index
      %530 = memref.load %arg3[%c87] : memref<98xf32, #tpu.memory_space<smem>>
      %531 = vector.broadcast %529 : f32 to vector<2x1xf32>
      %532 = vector.broadcast %530 : f32 to vector<2x1xf32>
      %533 = arith.select %153, %531, %532 : vector<2x1xi1>, vector<2x1xf32>
      %534 = vector.broadcast %533 : vector<2x1xf32> to vector<2x256xf32>
      %535 = arith.mulf %534, %173 : vector<2x256xf32>
      %536 = arith.addf %528, %535 : vector<2x256xf32>
      %c39 = arith.constant 39 : index
      %537 = memref.load %arg3[%c39] : memref<98xf32, #tpu.memory_space<smem>>
      %c88 = arith.constant 88 : index
      %538 = memref.load %arg3[%c88] : memref<98xf32, #tpu.memory_space<smem>>
      %539 = vector.broadcast %537 : f32 to vector<2x1xf32>
      %540 = vector.broadcast %538 : f32 to vector<2x1xf32>
      %541 = arith.select %153, %539, %540 : vector<2x1xi1>, vector<2x1xf32>
      %542 = vector.broadcast %541 : vector<2x1xf32> to vector<2x256xf32>
      %543 = arith.mulf %542, %178 : vector<2x256xf32>
      %544 = arith.addf %536, %543 : vector<2x256xf32>
      %c40 = arith.constant 40 : index
      %545 = memref.load %arg3[%c40] : memref<98xf32, #tpu.memory_space<smem>>
      %c89 = arith.constant 89 : index
      %546 = memref.load %arg3[%c89] : memref<98xf32, #tpu.memory_space<smem>>
      %547 = vector.broadcast %545 : f32 to vector<2x1xf32>
      %548 = vector.broadcast %546 : f32 to vector<2x1xf32>
      %549 = arith.select %153, %547, %548 : vector<2x1xi1>, vector<2x1xf32>
      %550 = vector.broadcast %549 : vector<2x1xf32> to vector<2x256xf32>
      %551 = arith.mulf %550, %183 : vector<2x256xf32>
      %552 = arith.addf %544, %551 : vector<2x256xf32>
      %c41 = arith.constant 41 : index
      %553 = memref.load %arg3[%c41] : memref<98xf32, #tpu.memory_space<smem>>
      %c90 = arith.constant 90 : index
      %554 = memref.load %arg3[%c90] : memref<98xf32, #tpu.memory_space<smem>>
      %555 = vector.broadcast %553 : f32 to vector<2x1xf32>
      %556 = vector.broadcast %554 : f32 to vector<2x1xf32>
      %557 = arith.select %153, %555, %556 : vector<2x1xi1>, vector<2x1xf32>
      %558 = vector.broadcast %557 : vector<2x1xf32> to vector<2x256xf32>
      %559 = arith.mulf %558, %188 : vector<2x256xf32>
      %560 = arith.addf %552, %559 : vector<2x256xf32>
      %c224_i32 = arith.constant 224 : i32
      %561 = tpu.dynamic_rotate %560 by %c224_i32 dim 1 : vector<2x256xf32>, i32 -> vector<2x256xf32>
      %cst_94 = arith.constant 0.000000e+00 : f32
      %562 = vector.shape_cast %141 : vector<1x256xi1> to vector<1x256xi1>
      %563 = vector.broadcast %562 : vector<1x256xi1> to vector<2x256xi1>
      %564 = vector.broadcast %cst_94 : f32 to vector<2x256xf32>
      %565 = arith.select %563, %561, %564 : vector<2x256xi1>, vector<2x256xf32>
      %566 = arith.addf %503, %565 : vector<2x256xf32>
      %cst_95 = arith.constant 0.000000e+00 : f32
      %567 = vector.broadcast %cst_95 : f32 to vector<2x256xf32>
      %c42 = arith.constant 42 : index
      %568 = memref.load %arg3[%c42] : memref<98xf32, #tpu.memory_space<smem>>
      %c91 = arith.constant 91 : index
      %569 = memref.load %arg3[%c91] : memref<98xf32, #tpu.memory_space<smem>>
      %570 = vector.broadcast %568 : f32 to vector<2x1xf32>
      %571 = vector.broadcast %569 : f32 to vector<2x1xf32>
      %572 = arith.select %153, %570, %571 : vector<2x1xi1>, vector<2x1xf32>
      %573 = vector.broadcast %572 : vector<2x1xf32> to vector<2x256xf32>
      %574 = arith.mulf %573, %159 : vector<2x256xf32>
      %575 = arith.addf %567, %574 : vector<2x256xf32>
      %c43 = arith.constant 43 : index
      %576 = memref.load %arg3[%c43] : memref<98xf32, #tpu.memory_space<smem>>
      %c92 = arith.constant 92 : index
      %577 = memref.load %arg3[%c92] : memref<98xf32, #tpu.memory_space<smem>>
      %578 = vector.broadcast %576 : f32 to vector<2x1xf32>
      %579 = vector.broadcast %577 : f32 to vector<2x1xf32>
      %580 = arith.select %153, %578, %579 : vector<2x1xi1>, vector<2x1xf32>
      %581 = vector.broadcast %580 : vector<2x1xf32> to vector<2x256xf32>
      %582 = arith.mulf %581, %164 : vector<2x256xf32>
      %583 = arith.addf %575, %582 : vector<2x256xf32>
      %c44 = arith.constant 44 : index
      %584 = memref.load %arg3[%c44] : memref<98xf32, #tpu.memory_space<smem>>
      %c93 = arith.constant 93 : index
      %585 = memref.load %arg3[%c93] : memref<98xf32, #tpu.memory_space<smem>>
      %586 = vector.broadcast %584 : f32 to vector<2x1xf32>
      %587 = vector.broadcast %585 : f32 to vector<2x1xf32>
      %588 = arith.select %153, %586, %587 : vector<2x1xi1>, vector<2x1xf32>
      %589 = vector.broadcast %588 : vector<2x1xf32> to vector<2x256xf32>
      %590 = arith.mulf %589, %169 : vector<2x256xf32>
      %591 = arith.addf %583, %590 : vector<2x256xf32>
      %c45 = arith.constant 45 : index
      %592 = memref.load %arg3[%c45] : memref<98xf32, #tpu.memory_space<smem>>
      %c94 = arith.constant 94 : index
      %593 = memref.load %arg3[%c94] : memref<98xf32, #tpu.memory_space<smem>>
      %594 = vector.broadcast %592 : f32 to vector<2x1xf32>
      %595 = vector.broadcast %593 : f32 to vector<2x1xf32>
      %596 = arith.select %153, %594, %595 : vector<2x1xi1>, vector<2x1xf32>
      %597 = vector.broadcast %596 : vector<2x1xf32> to vector<2x256xf32>
      %598 = arith.mulf %597, %173 : vector<2x256xf32>
      %599 = arith.addf %591, %598 : vector<2x256xf32>
      %c46 = arith.constant 46 : index
      %600 = memref.load %arg3[%c46] : memref<98xf32, #tpu.memory_space<smem>>
      %c95 = arith.constant 95 : index
      %601 = memref.load %arg3[%c95] : memref<98xf32, #tpu.memory_space<smem>>
      %602 = vector.broadcast %600 : f32 to vector<2x1xf32>
      %603 = vector.broadcast %601 : f32 to vector<2x1xf32>
      %604 = arith.select %153, %602, %603 : vector<2x1xi1>, vector<2x1xf32>
      %605 = vector.broadcast %604 : vector<2x1xf32> to vector<2x256xf32>
      %606 = arith.mulf %605, %178 : vector<2x256xf32>
      %607 = arith.addf %599, %606 : vector<2x256xf32>
      %c47 = arith.constant 47 : index
      %608 = memref.load %arg3[%c47] : memref<98xf32, #tpu.memory_space<smem>>
      %c96 = arith.constant 96 : index
      %609 = memref.load %arg3[%c96] : memref<98xf32, #tpu.memory_space<smem>>
      %610 = vector.broadcast %608 : f32 to vector<2x1xf32>
      %611 = vector.broadcast %609 : f32 to vector<2x1xf32>
      %612 = arith.select %153, %610, %611 : vector<2x1xi1>, vector<2x1xf32>
      %613 = vector.broadcast %612 : vector<2x1xf32> to vector<2x256xf32>
      %614 = arith.mulf %613, %183 : vector<2x256xf32>
      %615 = arith.addf %607, %614 : vector<2x256xf32>
      %c48 = arith.constant 48 : index
      %616 = memref.load %arg3[%c48] : memref<98xf32, #tpu.memory_space<smem>>
      %c97 = arith.constant 97 : index
      %617 = memref.load %arg3[%c97] : memref<98xf32, #tpu.memory_space<smem>>
      %618 = vector.broadcast %616 : f32 to vector<2x1xf32>
      %619 = vector.broadcast %617 : f32 to vector<2x1xf32>
      %620 = arith.select %153, %618, %619 : vector<2x1xi1>, vector<2x1xf32>
      %621 = vector.broadcast %620 : vector<2x1xf32> to vector<2x256xf32>
      %622 = arith.mulf %621, %188 : vector<2x256xf32>
      %623 = arith.addf %615, %622 : vector<2x256xf32>
      %c208_i32 = arith.constant 208 : i32
      %624 = tpu.dynamic_rotate %623 by %c208_i32 dim 1 : vector<2x256xf32>, i32 -> vector<2x256xf32>
      %cst_96 = arith.constant 0.000000e+00 : f32
      %625 = vector.shape_cast %150 : vector<1x256xi1> to vector<1x256xi1>
      %626 = vector.broadcast %625 : vector<1x256xi1> to vector<2x256xi1>
      %627 = vector.broadcast %cst_96 : f32 to vector<2x256xf32>
      %628 = arith.select %626, %624, %627 : vector<2x256xi1>, vector<2x256xf32>
      %629 = arith.addf %566, %628 : vector<2x256xf32>
      %630 = vector.extract_strided_slice %629 {offsets = [0, 0], sizes = [1, 256], strides = [1, 1]} : vector<2x256xf32> to vector<1x256xf32>
      %631 = vector.extract_strided_slice %629 {offsets = [1, 0], sizes = [1, 256], strides = [1, 1]} : vector<2x256xf32> to vector<1x256xf32>
      %632 = arith.addf %630, %631 : vector<1x256xf32>
      %633 = vector.broadcast %154 : f32 to vector<1x256xf32>
      %634 = arith.addf %632, %633 : vector<1x256xf32>
      %635 = arith.negf %634 : vector<1x256xf32>
      %636 = math.exp %635 : vector<1x256xf32>
      %cst_97 = arith.constant 1.000000e+00 : f32
      %637 = vector.broadcast %cst_97 : f32 to vector<1x256xf32>
      %638 = arith.addf %637, %636 : vector<1x256xf32>
      %639 = arith.divf %637, %638 : vector<1x256xf32>
      %640 = vector.shape_cast %639 : vector<1x256xf32> to vector<1x1x256xf32>
      %c0_98 = arith.constant 0 : index
      %c0_99 = arith.constant 0 : index
      %c0_100 = arith.constant 0 : index
      %641 = vector.load %arg5[%c0_98, %c0_99, %c0_100] : memref<1x1x256xf32, #tpu.memory_space<vmem>>, vector<1x1x256xf32>
      tpu.vector_store %arg5[%c0_98, %c0_99, %c0_100], %640 {strides = array<i32>} : memref<1x1x256xf32, #tpu.memory_space<vmem>>, vector<1x1x256xf32>,
    } else {
    }
    return
  }
  func.func @transform_0(%arg0: i32, %arg1: i32) -> (i32, i32, i32) {
    %c0_i32 = arith.constant 0 : i32
    %c0_i32_0 = arith.constant 0 : i32
    return %arg0, %arg1, %c0_i32 : i32, i32, i32
  }
  func.func @transform_1(%arg0: i32, %arg1: i32) -> i32 {
    %c0_i32 = arith.constant 0 : i32
    %c0_i32_0 = arith.constant 0 : i32
    return %c0_i32 : i32
  }
  func.func @transform_2(%arg0: i32, %arg1: i32) -> i32 {
    %c0_i32 = arith.constant 0 : i32
    %c0_i32_0 = arith.constant 0 : i32
    return %c0_i32 : i32
  }
  func.func @transform_3(%arg0: i32, %arg1: i32) -> (i32, i32, i32) {
    %c0_i32 = arith.constant 0 : i32
    %c0_i32_0 = arith.constant 0 : i32
    %c0_i32_1 = arith.constant 0 : i32
    return %arg0, %c0_i32, %c0_i32_0 : i32, i32, i32
  }
}

</mosaic_0001>

<llo_original>
// kernel: spatial_attention.1
$region0: #{spatial_attention.1}
  #allocation0 [shape = 'u32[]', space=smem, size = 0x4, offset = 0x4, fixed_abs, tag = 'smem constant byte address 0x4 - core index']
  #allocation1 [shape = 'u32[144,128]{1,0:T(1,128)}', space=vmem, size = 0x12000, scoped, tag = 'internal scratch']
  #allocation2 [shape = 'f32[1,256]{1,0:T(1,128)}', space=vmem, size = 0x400, scoped, tag = 'scratch operand']
  #allocation3 [shape = 'f32[1,256]{1,0:T(1,128)}', space=vmem, size = 0x400, scoped, tag = 'scratch operand']
  #allocation4 [shape = 'f32[1]{0:T(128)S(6)}', space=smem, size = 0x200, scoped, tag = 'scoped memory for spatial_attention.1']
  %s0 = inlined_call_operand.vmem [shape: f32[2,4,256], index: 0, kind: input, shape index: {}]
  %s1 = inlined_call_operand.vmem [shape: f32[98], index: 1, kind: input, shape index: {}]
  %s2 = inlined_call_operand.<no memory space> [shape: f32[1], index: 2, kind: input, shape index: {}]
  %s3 = inlined_call_operand.vmem [shape: f32[2,1,256], index: 3, kind: output, shape index: {}]
  %s4 = sld [smem:[#allocation0]]
  $region57: #{spatial_attention.1} parent=0
    _
  %s6 = ssub.s32 1, %s4
  %s7 = scalar_select 0, %s6, %s4
  %8 = sst [smem:[#allocation4]] %s2
  $region1: #{spatial_attention.1} parent=0
    #allocation5 [shape = 'u8[512]{0}', space=smem, size = 0x200, scoped, tag = 'input window, operand 1, single buffered']
    #allocation6 [shape = 's32[2]{0}', space=sflag, size = 0x8, scoped, tag = 'scoped memory for spatial_attention.1']
    %9 = vsyncpa [#allocation6], 0
    loop: start=0, step=1, limit=4
    $region2: #{spatial_attention.1} parent=1 // loop_pre_header
      _
    $region3: #{spatial_attention.1} parent=1 // loop_header
      %s11 = sphi 0, %s15
      %p12 = scmp.ge.s32.totalorder %s11, 4
      %s18 = sphi 0, %s30
      %s19 = sphi 0, %s26
      %s20 = sphi 0, %s18
      %s21 = sphi 0, %s19
      %s22 = sphi 0, %s20
      %s23 = sphi 0, %s21
      %s35 = sphi 0, %s37
      %s38 = sphi 0, %s35
      %s39 = sphi 0, %s38
      %s55 = sphi 0, %s39
      %s59 = sphi 0, %s59
      %s61 = sphi 0, %s59
      %s62 = sphi 0, %s61
      %s76 = sphi 0, %s62
      %s80 = sphi 0, %s80
      %s82 = sphi 0, %s80
      %s83 = sphi 0, %s82
      %s97 = sphi 0, %s83
      %s103 = sphi 0, %s105
      %s106 = sphi 0, %s103
      %s107 = sphi 0, %s106
      %s123 = sphi 0, %s107
    $region4: #{spatial_attention.1} parent=1 // loop_header_branch
      %14 = sbr.rel (%p12) target = $region8
    $region5: #{spatial_attention.1} parent=1 // loop_body
      %s16 = ssub.s32 %s11, 1
      %s17 = ssub.s32 %s11, 2
      %s24 = sadd.s32 1, %s19
      %p25 = scmp.ge.s32.totalorder %s24, 1
      %s26 = scalar_select %p25, 0, %s24
      %s27 = sadd.s32 1, %s18
      %s28 = scalar_select %p25, %s27, %s18
      %p29 = scmp.ge.s32.totalorder %s28, 2
      %s30 = scalar_select %p29, 0, %s28
      %s31 = ssub.s32 %s18, %s30
      %s32 = ssub.s32 %s19, %s26
      %s33 = sor.u32 %s31, %s32
      %p34 = scmp.eq.s32.totalorder %s33, 0
      %s36 = sadd.s32 %s35, 1
      %s37 = scalar_select %p34, %s35, %s36
      %p40 = pneg %p34
      %p41 = scmp.eq.s32.totalorder %s11, 1
      %p42 = por %p40, %p41
      %p43 = scmp.ne.s32.totalorder %s35, %s38
      %p44 = scmp.eq.s32.totalorder %s11, 0
      %p45 = por %p43, %p44
      %p46 = scmp.ne.s32.totalorder %s35, %s38
      %p47 = scmp.eq.s32.totalorder %s16, 1
      %p48 = por %p46, %p47
      %p49 = scmp.ne.s32.totalorder %s38, %s39
      %p50 = scmp.eq.s32.totalorder %s16, 0
      %p51 = por %p49, %p50
      %p52 = scmp.ne.s32.totalorder %s38, %s39
      %p53 = scmp.eq.s32.totalorder %s17, 1
      %p54 = por %p52, %p53
      %p56 = scmp.ne.s32.totalorder %s39, %s55
      %p57 = scmp.eq.s32.totalorder %s17, 0
      %p58 = por %p56, %p57
      %s60 = sadd.s32 %s59, 1
      %p63 = scmp.eq.s32.totalorder %s11, 1
      %p64 = scmp.ne.s32.totalorder %s59, %s61
      %p65 = scmp.eq.s32.totalorder %s11, 0
      %p66 = por %p64, %p65
      %p67 = scmp.ne.s32.totalorder %s59, %s61
      %p68 = scmp.eq.s32.totalorder %s16, 1
      %p69 = por %p67, %p68
      %p70 = scmp.ne.s32.totalorder %s61, %s62
      %p71 = scmp.eq.s32.totalorder %s16, 0
      %p72 = por %p70, %p71
      %p73 = scmp.ne.s32.totalorder %s61, %s62
      %p74 = scmp.eq.s32.totalorder %s17, 1
      %p75 = por %p73, %p74
      %p77 = scmp.ne.s32.totalorder %s62, %s76
      %p78 = scmp.eq.s32.totalorder %s17, 0
      %p79 = por %p77, %p78
      %s81 = sadd.s32 %s80, 1
      %p84 = scmp.eq.s32.totalorder %s11, 1
      %p85 = scmp.ne.s32.totalorder %s80, %s82
      %p86 = scmp.eq.s32.totalorder %s11, 0
      %p87 = por %p85, %p86
      %p88 = scmp.ne.s32.totalorder %s80, %s82
      %p89 = scmp.eq.s32.totalorder %s16, 1
      %p90 = por %p88, %p89
      %p91 = scmp.ne.s32.totalorder %s82, %s83
      %p92 = scmp.eq.s32.totalorder %s16, 0
      %p93 = por %p91, %p92
      %p94 = scmp.ne.s32.totalorder %s82, %s83
      %p95 = scmp.eq.s32.totalorder %s17, 1
      %p96 = por %p94, %p95
      %p98 = scmp.ne.s32.totalorder %s83, %s97
      %p99 = scmp.eq.s32.totalorder %s17, 0
      %p100 = por %p98, %p99
      %s101 = ssub.s32 %s18, %s30
      %p102 = scmp.eq.s32.totalorder %s101, 0
      %s104 = sadd.s32 %s103, 1
      %s105 = scalar_select %p102, %s103, %s104
      %p108 = pneg %p102
      %p109 = scmp.eq.s32.totalorder %s11, 1
      %p110 = por %p108, %p109
      %p111 = scmp.ne.s32.totalorder %s103, %s106
      %p112 = scmp.eq.s32.totalorder %s11, 0
      %p113 = por %p111, %p112
      %p114 = scmp.ne.s32.totalorder %s103, %s106
      %p115 = scmp.eq.s32.totalorder %s16, 1
      %p116 = por %p114, %p115
      %p117 = scmp.ne.s32.totalorder %s106, %s107
      %p118 = scmp.eq.s32.totalorder %s16, 0
      %p119 = por %p117, %p118
      %p120 = scmp.ne.s32.totalorder %s106, %s107
      %p121 = scmp.eq.s32.totalorder %s17, 1
      %p122 = por %p120, %p121
      %p124 = scmp.ne.s32.totalorder %s107, %s123
      %p125 = scmp.eq.s32.totalorder %s17, 0
      %p126 = por %p124, %p125
      %p127 = scmp.le.s32.totalorder 1, %s11
      %p128 = scmp.lt.s32.totalorder %s11, 3
      %p129 = pnand %p127, %p128
      %p130 = pneg %p129
      // Predicated region
      $region9: #{spatial_attention.1} parent=5 // pred_check
        _
      $region10: #{spatial_attention.1} parent=5 // pred_check_branch
        %132 = sbr.rel (%p129) target = $region12
      $region11: #{spatial_attention.1} parent=5 // pred_region
        %s133 = ssub.s32 %s11, 1
        // Predicated region
        $region13: #{spatial_attention.1} parent=11 // pred_check
          %p134 = pneg %p72
        $region14: #{spatial_attention.1} parent=11 // pred_check_branch
          %136 = sbr.rel (%p134) target = $region16
        $region15: #{spatial_attention.1} parent=11 // pred_region
          %s138 = ssub.s32 16, 16
          %139 = vsyncadd [#allocation6], %s138
          %s141 = sshll.u32 %s1, 4
          %s142 = int_to_ptr.vmem [resolvable:$true] %s141
          %144 = dma.vmem_to_smem %s142, 16, [#allocation5], [#allocation6]
        $region16: #{spatial_attention.1} parent=11 // pred_fallthru
          _
        // Predicated region
        $region17: #{spatial_attention.1} parent=11 // pred_check
          %p145 = pneg %p93
        $region18: #{spatial_attention.1} parent=11 // pred_check_branch
          %147 = sbr.rel (%p145) target = $region20
        $region19: #{spatial_attention.1} parent=11 // pred_region
          _
        $region20: #{spatial_attention.1} parent=11 // pred_fallthru
          _
      $region12: #{spatial_attention.1} parent=5 // pred_fallthru
        _
      %p148 = scmp.lt.s32.totalorder %s11, 2
      // Predicated region
      $region21: #{spatial_attention.1} parent=5 // pred_check
        %p149 = pneg %p148
      $region22: #{spatial_attention.1} parent=5 // pred_check_branch
        %151 = sbr.rel (%p149) target = $region24
      $region23: #{spatial_attention.1} parent=5 // pred_region
        // Predicated region
        $region25: #{spatial_attention.1} parent=23 // pred_check
          %p152 = pneg %p45
        $region26: #{spatial_attention.1} parent=23 // pred_check_branch
          %154 = sbr.rel (%p152) target = $region28
        $region27: #{spatial_attention.1} parent=23 // pred_region
          %p155 = scmp.lt.s32.totalorder %s18, 1
          %s156 = scalar_select %p155, %s18, 1
          %p157 = scmp.lt.s32.totalorder %s19, 0
          %s158 = scalar_select %p157, %s19, 0
          %s159 = smul.addr %s158, 2
          %s160 = smul.addr %s156, 2
          %s161 = sadd.s32 %s159, %s160
          %s162 = smul.addr %s161, 4
          %s163 = scalar_lea.vmem %s0, %s162
        $region28: #{spatial_attention.1} parent=23 // pred_fallthru
          _
      $region24: #{spatial_attention.1} parent=5 // pred_fallthru
        _
      %p164 = scmp.le.s32.totalorder 1, %s11
      %p165 = scmp.lt.s32.totalorder %s11, 3
      %p166 = pnand %p164, %p165
      %p167 = pneg %p166
      // Predicated region
      $region29: #{spatial_attention.1} parent=5 // pred_check
        _
      $region30: #{spatial_attention.1} parent=5 // pred_check_branch
        %169 = sbr.rel (%p166) target = $region32
      $region31: #{spatial_attention.1} parent=5 // pred_region
        %s170 = ssub.s32 %s11, 1
        // Predicated region
        $region33: #{spatial_attention.1} parent=31 // pred_check
          %p171 = pneg %p72
        $region34: #{spatial_attention.1} parent=31 // pred_check_branch
          %173 = sbr.rel (%p171) target = $region36
        $region35: #{spatial_attention.1} parent=31 // pred_region
          %174 = dma.done [#allocation6], 16
        $region36: #{spatial_attention.1} parent=31 // pred_fallthru
          _
        %175 = sfence
        %p176 = scmp.lt.s32.totalorder %s20, 1
        %s177 = scalar_select %p176, %s20, 1
        %p178 = scmp.lt.s32.totalorder %s21, 0
        %s179 = scalar_select %p178, %s21, 0
        %s180 = smul.addr %s179, 2
        %s181 = smul.addr %s177, 2
        %s182 = sadd.s32 %s180, %s181
        %s183 = smul.addr %s182, 4
        %s184 = scalar_lea.vmem %s0, %s183
        %p185 = pneg %p51
        %p186 = pneg %p48
        %p187 = pneg %p72
        %p188 = pneg %p69
        %p189 = pneg %p93
        %p190 = pneg %p90
        %p191 = pneg %p119
        %p192 = pneg %p116
        %p193 = scmp.lt.s32.totalorder %s20, 1
        %s194 = scalar_select %p193, %s20, 1
        %s195 = smul.addr %s194, 2
        %s196 = scalar_lea.vmem %s3, %s195
        %p197 = scmp.lt.s32.totalorder %s20, 1
        %s198 = scalar_select %p197, %s20, 1
        %p199 = scmp.lt.s32.totalorder %s21, 0
        %s200 = scalar_select %p199, %s21, 0
        %s201 = smul.addr %s200, 2
        %s202 = smul.addr %s198, 2
        %s203 = sadd.s32 %s201, %s202
        %s204 = smul.addr %s203, 4
        %s205 = scalar_lea.vmem %s0, %s204
        %p206 = scmp.lt.s32.totalorder %s20, 1
        %s207 = scalar_select %p206, %s20, 1
        %s208 = smul.addr %s207, 2
        %s209 = scalar_lea.vmem %s3, %s208
        %p210 = scmp.eq.s32.totalorder %s21, 0
        // Predicated region
        $region37: #{spatial_attention.1} parent=31 // pred_check
          %p211 = pneg %p210
        $region38: #{spatial_attention.1} parent=31 // pred_check_branch
          %213 = sbr.rel (%p211) target = $region40
        $region39: #{spatial_attention.1} parent=31 // pred_region
          %v214 = vlaneseq
          %vm215 = vcmp.ge.s32.totalorder %v214, 0
          %vm216 = vcmp.lt.s32.totalorder %v214, 256
          %vm217 = vmand %vm215, %vm216
          %218 = vst.msk [vmem:[#allocation2] sm:$0x3] %vm217, -inf
          %219 = vst.msk [vmem:[#allocation3] sm:$0x3] %vm217, 0.0
        $region40: #{spatial_attention.1} parent=31 // pred_fallthru
          _
        %v220 = vld [vmem:[%s205] sm:$0xff]
        %v221 = vld [vmem:[#allocation2] sm:$0x3]
        %v223 = vcombine.high %v220, %v220
        %vm225 = vcmask 1043456
        %v226 = vsel %vm225, %v220, -inf
        %v227 = vrot.slane %v226, 4
        %v228 = vmax.f32 %v226, %v227
        %v229 = vrot.slane %v228, 2
        %v230 = vmax.f32 %v228, %v229
        %v231 = vrot.slane %v230, 1
        %v232 = vmax.f32 %v230, %v231
        %v233 = vsel %vm225, %v223, -inf
        %v234 = vrot.slane %v233, 4
        %v235 = vmax.f32 %v233, %v234
        %v236 = vrot.slane %v235, 2
        %v237 = vmax.f32 %v235, %v236
        %v238 = vrot.slane %v237, 1
        %v239 = vmax.f32 %v237, %v238
        %v242 = vcombine.low %v232, %v239
        %v244 = vunpack.c.l.s4 1966171168
        %v245 = vunpack.c.0.s8 %v244
        %v246 = vlaneseq
        %v247 = vshrl.u32 %v246, 7
        %v248 = vsub.s32 %v245, %v247
        %v249 = vrot.slane %v242, %v248
        %v251 = vunpack.c.l.s4 1966171168
        %v252 = vunpack.c.0.s8 %v251
        %v253 = vlaneseq
        %v254 = vshrl.u32 %v253, 7
        %v255 = vsub.s32 %v252, %v254
        %v256 = vrot.slane %v249, %v255
        %v258 = vmax.f32 %v221, %v256
        %v259 = vlaneseq
        %vm260 = vcmp.ge.s32.totalorder %v259, 0
        %vm261 = vcmp.lt.s32.totalorder %v259, 256
        %vm262 = vmand %vm260, %vm261
        %263 = vst.msk [vmem:[#allocation2] sm:$0x3] %vm262, %v258
        %v264 = vld [vmem:[#allocation3] sm:$0x3]
        %v265 = vsel %vm225, %v220, 0.0
        %v266 = vrot.slane %v265, 4
        %v267 = vadd.f32 %v265, %v266
        %v268 = vrot.slane %v267, 2
        %v269 = vadd.f32 %v267, %v268
        %v270 = vrot.slane %v269, 1
        %v271 = vadd.f32 %v269, %v270
        %v272 = vsel %vm225, %v223, 0.0
        %v273 = vrot.slane %v272, 4
        %v274 = vadd.f32 %v272, %v273
        %v275 = vrot.slane %v274, 2
        %v276 = vadd.f32 %v274, %v275
        %v277 = vrot.slane %v276, 1
        %v278 = vadd.f32 %v276, %v277
        %v281 = vcombine.low %v271, %v278
        %v283 = vunpack.c.l.s4 1966171168
        %v284 = vunpack.c.0.s8 %v283
        %v285 = vlaneseq
        %v286 = vshrl.u32 %v285, 7
        %v287 = vsub.s32 %v284, %v286
        %v288 = vrot.slane %v281, %v287
        %v290 = vunpack.c.l.s4 1966171168
        %v291 = vunpack.c.0.s8 %v290
        %v292 = vlaneseq
        %v293 = vshrl.u32 %v292, 7
        %v294 = vsub.s32 %v291, %v293
        %v295 = vrot.slane %v288, %v294
        %v297 = vadd.f32 %v264, %v295
        %298 = vst.msk [vmem:[#allocation3] sm:$0x3] %vm262, %v297
        // Predicated region
        $region41: #{spatial_attention.1} parent=31 // pred_check
          %p299 = pneg %p210
        $region42: #{spatial_attention.1} parent=31 // pred_check_branch
          %301 = sbr.rel (%p299) target = $region44
        $region43: #{spatial_attention.1} parent=31 // pred_region
          %v302 = vld [vmem:[#allocation2] sm:$0x3]
          %v303 = vld [vmem:[#allocation3] sm:$0x3]
          %v304 = vmul.f32 %v303, 0.25
          %v306 = vlaneseq
          %v307 = vshrl.u32 %v306, 7
          %v308 = vsub.s32 0, %v307
          %v309 = vrot.slane %v302, %v308
          %v310 = vlaneseq
          %v311 = vshrl.u32 %v310, 7
          %v312 = vsub.s32 1, %v311
          %v313 = vrot.slane %v302, %v312
          %v317 = vlaneseq
          %v318 = vshrl.u32 %v317, 7
          %v319 = vsub.s32 0, %v318
          %v320 = vrot.slane %v304, %v319
          %v321 = vlaneseq
          %v322 = vshrl.u32 %v321, 7
          %v323 = vsub.s32 1, %v322
          %v324 = vrot.slane %v304, %v323
          %vm327 = vcmask 1040384
          %v328 = vsel %vm327, %v309, %v320
          %v329 = vsel %vm327, %v313, %v324
          %v330 = vlaneseq
          %v331 = vand.u32 %v330, 127
          %v332 = vadd.s32 %v331, 128
          %v333 = vand.u32 %v331, 15
          %v334 = vand.u32 %v332, 15
          %v335 = vshra.s32 %v331, 4
          %v336 = vshra.s32 %v332, 4
          %v337 = vadd.s32 %v333, 4294967293
          %v338 = vadd.s32 %v334, 4294967293
          %vm339 = vcmp.ge.s32.totalorder %v337, 0
          %vm340 = vcmp.ge.s32.totalorder %v338, 0
          %vm341 = vcmp.lt.s32.totalorder %v337, 16
          %vm342 = vcmp.lt.s32.totalorder %v338, 16
          %vm343 = vmand %vm339, %vm341
          %vm344 = vmand %vm340, %vm342
          %v345 = vadd.s32 %v333, 4294967294
          %v346 = vadd.s32 %v334, 4294967294
          %vm347 = vcmp.ge.s32.totalorder %v345, 0
          %vm348 = vcmp.ge.s32.totalorder %v346, 0
          %vm349 = vcmp.lt.s32.totalorder %v345, 16
          %vm350 = vcmp.lt.s32.totalorder %v346, 16
          %vm351 = vmand %vm347, %vm349
          %vm352 = vmand %vm348, %vm350
          %v353 = vadd.s32 %v333, 4294967295
          %v354 = vadd.s32 %v334, 4294967295
          %vm355 = vcmp.ge.s32.totalorder %v353, 0
          %vm356 = vcmp.ge.s32.totalorder %v354, 0
          %vm357 = vcmp.lt.s32.totalorder %v353, 16
          %vm358 = vcmp.lt.s32.totalorder %v354, 16
          %vm359 = vmand %vm355, %vm357
          %vm360 = vmand %vm356, %vm358
          %vm361 = vcmp.ge.s32.totalorder %v333, 0
          %vm362 = vcmp.ge.s32.totalorder %v334, 0
          %vm363 = vcmp.lt.s32.totalorder %v333, 16
          %vm364 = vcmp.lt.s32.totalorder %v334, 16
          %vm365 = vmand %vm361, %vm363
          %vm366 = vmand %vm362, %vm364
          %v367 = vadd.s32 %v333, 1
          %v368 = vadd.s32 %v334, 1
          %vm369 = vcmp.ge.s32.totalorder %v367, 0
          %vm370 = vcmp.ge.s32.totalorder %v368, 0
          %vm371 = vcmp.lt.s32.totalorder %v367, 16
          %vm372 = vcmp.lt.s32.totalorder %v368, 16
          %vm373 = vmand %vm369, %vm371
          %vm374 = vmand %vm370, %vm372
          %v375 = vadd.s32 %v333, 2
          %v376 = vadd.s32 %v334, 2
          %vm377 = vcmp.ge.s32.totalorder %v375, 0
          %vm378 = vcmp.ge.s32.totalorder %v376, 0
          %vm379 = vcmp.lt.s32.totalorder %v375, 16
          %vm380 = vcmp.lt.s32.totalorder %v376, 16
          %vm381 = vmand %vm377, %vm379
          %vm382 = vmand %vm378, %vm380
          %v383 = vadd.s32 %v333, 3
          %v384 = vadd.s32 %v334, 3
          %vm385 = vcmp.ge.s32.totalorder %v383, 0
          %vm386 = vcmp.ge.s32.totalorder %v384, 0
          %vm387 = vcmp.lt.s32.totalorder %v383, 16
          %vm388 = vcmp.lt.s32.totalorder %v384, 16
          %vm389 = vmand %vm385, %vm387
          %vm390 = vmand %vm386, %vm388
          %v391 = vadd.s32 %v335, 4294967293
          %v392 = vadd.s32 %v336, 4294967293
          %vm393 = vcmp.ge.s32.totalorder %v391, 0
          %vm394 = vcmp.ge.s32.totalorder %v392, 0
          %vm395 = vcmp.lt.s32.totalorder %v391, 16
          %vm396 = vcmp.lt.s32.totalorder %v392, 16
          %vm397 = vmand %vm393, %vm395
          %vm398 = vmand %vm394, %vm396
          %v399 = vadd.s32 %v335, 4294967294
          %v400 = vadd.s32 %v336, 4294967294
          %vm401 = vcmp.ge.s32.totalorder %v399, 0
          %vm402 = vcmp.ge.s32.totalorder %v400, 0
          %vm403 = vcmp.lt.s32.totalorder %v399, 16
          %vm404 = vcmp.lt.s32.totalorder %v400, 16
          %vm405 = vmand %vm401, %vm403
          %vm406 = vmand %vm402, %vm404
          %v407 = vadd.s32 %v335, 4294967295
          %v408 = vadd.s32 %v336, 4294967295
          %vm409 = vcmp.ge.s32.totalorder %v407, 0
          %vm410 = vcmp.ge.s32.totalorder %v408, 0
          %vm411 = vcmp.lt.s32.totalorder %v407, 16
          %vm412 = vcmp.lt.s32.totalorder %v408, 16
          %vm413 = vmand %vm409, %vm411
          %vm414 = vmand %vm410, %vm412
          %vm415 = vcmp.ge.s32.totalorder %v335, 0
          %vm416 = vcmp.ge.s32.totalorder %v336, 0
          %vm417 = vcmp.lt.s32.totalorder %v335, 16
          %vm418 = vcmp.lt.s32.totalorder %v336, 16
          %vm419 = vmand %vm415, %vm417
          %vm420 = vmand %vm416, %vm418
          %v421 = vadd.s32 %v335, 1
          %v422 = vadd.s32 %v336, 1
          %vm423 = vcmp.ge.s32.totalorder %v421, 0
          %vm424 = vcmp.ge.s32.totalorder %v422, 0
          %vm425 = vcmp.lt.s32.totalorder %v421, 16
          %vm426 = vcmp.lt.s32.totalorder %v422, 16
          %vm427 = vmand %vm423, %vm425
          %vm428 = vmand %vm424, %vm426
          %v429 = vadd.s32 %v335, 2
          %v430 = vadd.s32 %v336, 2
          %vm431 = vcmp.ge.s32.totalorder %v429, 0
          %vm432 = vcmp.ge.s32.totalorder %v430, 0
          %vm433 = vcmp.lt.s32.totalorder %v429, 16
          %vm434 = vcmp.lt.s32.totalorder %v430, 16
          %vm435 = vmand %vm431, %vm433
          %vm436 = vmand %vm432, %vm434
          %v437 = vadd.s32 %v335, 3
          %v438 = vadd.s32 %v336, 3
          %vm439 = vcmp.ge.s32.totalorder %v437, 0
          %vm440 = vcmp.ge.s32.totalorder %v438, 0
          %vm441 = vcmp.lt.s32.totalorder %v437, 16
          %vm442 = vcmp.lt.s32.totalorder %v438, 16
          %vm443 = vmand %vm439, %vm441
          %vm444 = vmand %vm440, %vm442
          %v445 = vlaneseq
          %v446 = vshrl.u32 %v445, 7
          %vm447 = vcmp.lt.s32.totalorder %v446, 1
          %s448 = sld [smem:[#allocation4]]
          %449 = vrot.lane.b32.xlu0 %v328, 3
          %v450 = vpop.permute.xlu0 %449
          %451 = vrot.lane.b32.xlu0 %v329, 3
          %v452 = vpop.permute.xlu0 %451
          %vm453 = vcmp.lt.s32.totalorder %v331, 3
          %v454 = vsel %vm453, %v450, %v452
          %v455 = vsel %vm453, %v452, %v450
          %v456 = vsel %vm343, 1, 0
          %v457 = vsel %vm344, 1, 0
          %vm458 = vcmp.eq.s32.totalorder %v456, 1
          %vm459 = vcmp.eq.s32.totalorder %v457, 1
          %v460 = vsel %vm458, %v455, 0.0
          %v461 = vsel %vm459, %v454, 0.0
          %462 = vrot.lane.b32.xlu0 %v328, 2
          %v463 = vpop.permute.xlu0 %462
          %464 = vrot.lane.b32.xlu0 %v329, 2
          %v465 = vpop.permute.xlu0 %464
          %vm466 = vcmp.lt.s32.totalorder %v331, 2
          %v467 = vsel %vm466, %v463, %v465
          %v468 = vsel %vm466, %v465, %v463
          %v469 = vsel %vm351, 1, 0
          %v470 = vsel %vm352, 1, 0
          %vm471 = vcmp.eq.s32.totalorder %v469, 1
          %vm472 = vcmp.eq.s32.totalorder %v470, 1
          %v473 = vsel %vm471, %v468, 0.0
          %v474 = vsel %vm472, %v467, 0.0
          %475 = vrot.lane.b32.xlu0 %v328, 1
          %v476 = vpop.permute.xlu0 %475
          %477 = vrot.lane.b32.xlu0 %v329, 1
          %v478 = vpop.permute.xlu0 %477
          %vm479 = vcmp.lt.s32.totalorder %v331, 1
          %v480 = vsel %vm479, %v476, %v478
          %v481 = vsel %vm479, %v478, %v476
          %v482 = vsel %vm359, 1, 0
          %v483 = vsel %vm360, 1, 0
          %vm484 = vcmp.eq.s32.totalorder %v482, 1
          %vm485 = vcmp.eq.s32.totalorder %v483, 1
          %v486 = vsel %vm484, %v481, 0.0
          %v487 = vsel %vm485, %v480, 0.0
          %v488 = vsel %vm365, 1, 0
          %v489 = vsel %vm366, 1, 0
          %vm490 = vcmp.eq.s32.totalorder %v488, 1
          %vm491 = vcmp.eq.s32.totalorder %v489, 1
          %v492 = vsel %vm490, %v328, 0.0
          %v493 = vsel %vm491, %v329, 0.0
          %494 = vrot.lane.b32.xlu0 %v328, 127
          %v495 = vpop.permute.xlu0 %494
          %496 = vrot.lane.b32.xlu0 %v329, 127
          %v497 = vpop.permute.xlu0 %496
          %vm498 = vcmp.lt.s32.totalorder %v331, 127
          %v499 = vsel %vm498, %v495, %v497
          %v500 = vsel %vm498, %v497, %v495
          %v501 = vsel %vm373, 1, 0
          %v502 = vsel %vm374, 1, 0
          %vm503 = vcmp.eq.s32.totalorder %v501, 1
          %vm504 = vcmp.eq.s32.totalorder %v502, 1
          %v505 = vsel %vm503, %v499, 0.0
          %v506 = vsel %vm504, %v500, 0.0
          %507 = vrot.lane.b32.xlu0 %v328, 126
          %v508 = vpop.permute.xlu0 %507
          %509 = vrot.lane.b32.xlu0 %v329, 126
          %v510 = vpop.permute.xlu0 %509
          %vm511 = vcmp.lt.s32.totalorder %v331, 126
          %v512 = vsel %vm511, %v508, %v510
          %v513 = vsel %vm511, %v510, %v508
          %v514 = vsel %vm381, 1, 0
          %v515 = vsel %vm382, 1, 0
          %vm516 = vcmp.eq.s32.totalorder %v514, 1
          %vm517 = vcmp.eq.s32.totalorder %v515, 1
          %v518 = vsel %vm516, %v512, 0.0
          %v519 = vsel %vm517, %v513, 0.0
          %520 = vrot.lane.b32.xlu0 %v328, 125
          %v521 = vpop.permute.xlu0 %520
          %522 = vrot.lane.b32.xlu0 %v329, 125
          %v523 = vpop.permute.xlu0 %522
          %vm524 = vcmp.lt.s32.totalorder %v331, 125
          %v525 = vsel %vm524, %v521, %v523
          %v526 = vsel %vm524, %v523, %v521
          %v527 = vsel %vm389, 1, 0
          %v528 = vsel %vm390, 1, 0
          %vm529 = vcmp.eq.s32.totalorder %v527, 1
          %vm530 = vcmp.eq.s32.totalorder %v528, 1
          %v531 = vsel %vm529, %v525, 0.0
          %v532 = vsel %vm530, %v526, 0.0
          %s533 = sld [smem:[#allocation5]]
          %s534 = sld [smem:[#allocation5 + $0x31]]
          %v535 = vstv %s533
          %v536 = vstv %s534
          %v537 = vsel %vm447, %v535, %v536
          %v538 = vmul.f32 %v537, %v460
          %v539 = vmul.f32 %v537, %v461
          %v540 = vadd.f32 %v538, 0.0
          %v541 = vadd.f32 %v539, 0.0
          %s542 = sld [smem:[#allocation5 + $0x1]]
          %s543 = sld [smem:[#allocation5 + $0x32]]
          %v544 = vstv %s542
          %v545 = vstv %s543
          %v546 = vsel %vm447, %v544, %v545
          %v547 = vmul.f32 %v546, %v473
          %v548 = vmul.f32 %v546, %v474
          %v549 = vadd.f32 %v540, %v547
          %v550 = vadd.f32 %v541, %v548
          %s551 = sld [smem:[#allocation5 + $0x2]]
          %s552 = sld [smem:[#allocation5 + $0x33]]
          %v553 = vstv %s551
          %v554 = vstv %s552
          %v555 = vsel %vm447, %v553, %v554
          %v556 = vmul.f32 %v555, %v486
          %v557 = vmul.f32 %v555, %v487
          %v558 = vadd.f32 %v549, %v556
          %v559 = vadd.f32 %v550, %v557
          %s560 = sld [smem:[#allocation5 + $0x3]]
          %s561 = sld [smem:[#allocation5 + $0x34]]
          %v562 = vstv %s560
          %v563 = vstv %s561
          %v564 = vsel %vm447, %v562, %v563
          %v565 = vmul.f32 %v564, %v492
          %v566 = vmul.f32 %v564, %v493
          %v567 = vadd.f32 %v558, %v565
          %v568 = vadd.f32 %v559, %v566
          %s569 = sld [smem:[#allocation5 + $0x4]]
          %s570 = sld [smem:[#allocation5 + $0x35]]
          %v571 = vstv %s569
          %v572 = vstv %s570
          %v573 = vsel %vm447, %v571, %v572
          %v574 = vmul.f32 %v573, %v505
          %v575 = vmul.f32 %v573, %v506
          %v576 = vadd.f32 %v567, %v574
          %v577 = vadd.f32 %v568, %v575
          %s578 = sld [smem:[#allocation5 + $0x5]]
          %s579 = sld [smem:[#allocation5 + $0x36]]
          %v580 = vstv %s578
          %v581 = vstv %s579
          %v582 = vsel %vm447, %v580, %v581
          %v583 = vmul.f32 %v582, %v518
          %v584 = vmul.f32 %v582, %v519
          %v585 = vadd.f32 %v576, %v583
          %v586 = vadd.f32 %v577, %v584
          %s587 = sld [smem:[#allocation5 + $0x6]]
          %s588 = sld [smem:[#allocation5 + $0x37]]
          %v589 = vstv %s587
          %v590 = vstv %s588
          %v591 = vsel %vm447, %v589, %v590
          %v592 = vmul.f32 %v591, %v531
          %v593 = vmul.f32 %v591, %v532
          %v594 = vadd.f32 %v585, %v592
          %v595 = vadd.f32 %v586, %v593
          %596 = vrot.lane.b32.xlu0 %v594, 48
          %v597 = vpop.permute.xlu0 %596
          %598 = vrot.lane.b32.xlu0 %v595, 48
          %v599 = vpop.permute.xlu0 %598
          %vm600 = vcmp.lt.s32.totalorder %v331, 48
          %v601 = vsel %vm600, %v597, %v599
          %v602 = vsel %vm600, %v599, %v597
          %v603 = vsel %vm397, 1, 0
          %v604 = vsel %vm398, 1, 0
          %vm605 = vcmp.eq.s32.totalorder %v603, 1
          %vm606 = vcmp.eq.s32.totalorder %v604, 1
          %v607 = vsel %vm605, %v602, 0.0
          %v608 = vsel %vm606, %v601, 0.0
          %v609 = vadd.f32 %v607, 0.0
          %v610 = vadd.f32 %v608, 0.0
          %s611 = sld [smem:[#allocation5 + $0x7]]
          %s612 = sld [smem:[#allocation5 + $0x38]]
          %v613 = vstv %s611
          %v614 = vstv %s612
          %v615 = vsel %vm447, %v613, %v614
          %v616 = vmul.f32 %v615, %v460
          %v617 = vmul.f32 %v615, %v461
          %v618 = vadd.f32 %v616, 0.0
          %v619 = vadd.f32 %v617, 0.0
          %s620 = sld [smem:[#allocation5 + $0x8]]
          %s621 = sld [smem:[#allocation5 + $0x39]]
          %v622 = vstv %s620
          %v623 = vstv %s621
          %v624 = vsel %vm447, %v622, %v623
          %v625 = vmul.f32 %v624, %v473
          %v626 = vmul.f32 %v624, %v474
          %v627 = vadd.f32 %v618, %v625
          %v628 = vadd.f32 %v619, %v626
          %s629 = sld [smem:[#allocation5 + $0x9]]
          %s630 = sld [smem:[#allocation5 + $0x3a]]
          %v631 = vstv %s629
          %v632 = vstv %s630
          %v633 = vsel %vm447, %v631, %v632
          %v634 = vmul.f32 %v633, %v486
          %v635 = vmul.f32 %v633, %v487
          %v636 = vadd.f32 %v627, %v634
          %v637 = vadd.f32 %v628, %v635
          %s638 = sld [smem:[#allocation5 + $0xa]]
          %s639 = sld [smem:[#allocation5 + $0x3b]]
          %v640 = vstv %s638
          %v641 = vstv %s639
          %v642 = vsel %vm447, %v640, %v641
          %v643 = vmul.f32 %v642, %v492
          %v644 = vmul.f32 %v642, %v493
          %v645 = vadd.f32 %v636, %v643
          %v646 = vadd.f32 %v637, %v644
          %s647 = sld [smem:[#allocation5 + $0xb]]
          %s648 = sld [smem:[#allocation5 + $0x3c]]
          %v649 = vstv %s647
          %v650 = vstv %s648
          %v651 = vsel %vm447, %v649, %v650
          %v652 = vmul.f32 %v651, %v505
          %v653 = vmul.f32 %v651, %v506
          %v654 = vadd.f32 %v645, %v652
          %v655 = vadd.f32 %v646, %v653
          %s656 = sld [smem:[#allocation5 + $0xc]]
          %s657 = sld [smem:[#allocation5 + $0x3d]]
          %v658 = vstv %s656
          %v659 = vstv %s657
          %v660 = vsel %vm447, %v658, %v659
          %v661 = vmul.f32 %v660, %v518
          %v662 = vmul.f32 %v660, %v519
          %v663 = vadd.f32 %v654, %v661
          %v664 = vadd.f32 %v655, %v662
          %s665 = sld [smem:[#allocation5 + $0xd]]
          %s666 = sld [smem:[#allocation5 + $0x3e]]
          %v667 = vstv %s665
          %v668 = vstv %s666
          %v669 = vsel %vm447, %v667, %v668
          %v670 = vmul.f32 %v669, %v531
          %v671 = vmul.f32 %v669, %v532
          %v672 = vadd.f32 %v663, %v670
          %v673 = vadd.f32 %v664, %v671
          %674 = vrot.lane.b32.xlu0 %v672, 32
          %v675 = vpop.permute.xlu0 %674
          %676 = vrot.lane.b32.xlu0 %v673, 32
          %v677 = vpop.permute.xlu0 %676
          %vm678 = vcmp.lt.s32.totalorder %v331, 32
          %v679 = vsel %vm678, %v675, %v677
          %v680 = vsel %vm678, %v677, %v675
          %v681 = vsel %vm405, 1, 0
          %v682 = vsel %vm406, 1, 0
          %vm683 = vcmp.eq.s32.totalorder %v681, 1
          %vm684 = vcmp.eq.s32.totalorder %v682, 1
          %v685 = vsel %vm683, %v680, 0.0
          %v686 = vsel %vm684, %v679, 0.0
          %v687 = vadd.f32 %v609, %v685
          %v688 = vadd.f32 %v610, %v686
          %s689 = sld [smem:[#allocation5 + $0xe]]
          %s690 = sld [smem:[#allocation5 + $0x3f]]
          %v691 = vstv %s689
          %v692 = vstv %s690
          %v693 = vsel %vm447, %v691, %v692
          %v694 = vmul.f32 %v693, %v460
          %v695 = vmul.f32 %v693, %v461
          %v696 = vadd.f32 %v694, 0.0
          %v697 = vadd.f32 %v695, 0.0
          %s698 = sld [smem:[#allocation5 + $0xf]]
          %s699 = sld [smem:[#allocation5 + $0x40]]
          %v700 = vstv %s698
          %v701 = vstv %s699
          %v702 = vsel %vm447, %v700, %v701
          %v703 = vmul.f32 %v702, %v473
          %v704 = vmul.f32 %v702, %v474
          %v705 = vadd.f32 %v696, %v703
          %v706 = vadd.f32 %v697, %v704
          %s707 = sld [smem:[#allocation5 + $0x10]]
          %s708 = sld [smem:[#allocation5 + $0x41]]
          %v709 = vstv %s707
          %v710 = vstv %s708
          %v711 = vsel %vm447, %v709, %v710
          %v712 = vmul.f32 %v711, %v486
          %v713 = vmul.f32 %v711, %v487
          %v714 = vadd.f32 %v705, %v712
          %v715 = vadd.f32 %v706, %v713
          %s716 = sld [smem:[#allocation5 + $0x11]]
          %s717 = sld [smem:[#allocation5 + $0x42]]
          %v718 = vstv %s716
          %v719 = vstv %s717
          %v720 = vsel %vm447, %v718, %v719
          %v721 = vmul.f32 %v720, %v492
          %v722 = vmul.f32 %v720, %v493
          %v723 = vadd.f32 %v714, %v721
          %v724 = vadd.f32 %v715, %v722
          %s725 = sld [smem:[#allocation5 + $0x12]]
          %s726 = sld [smem:[#allocation5 + $0x43]]
          %v727 = vstv %s725
          %v728 = vstv %s726
          %v729 = vsel %vm447, %v727, %v728
          %v730 = vmul.f32 %v729, %v505
          %v731 = vmul.f32 %v729, %v506
          %v732 = vadd.f32 %v723, %v730
          %v733 = vadd.f32 %v724, %v731
          %s734 = sld [smem:[#allocation5 + $0x13]]
          %s735 = sld [smem:[#allocation5 + $0x44]]
          %v736 = vstv %s734
          %v737 = vstv %s735
          %v738 = vsel %vm447, %v736, %v737
          %v739 = vmul.f32 %v738, %v518
          %v740 = vmul.f32 %v738, %v519
          %v741 = vadd.f32 %v732, %v739
          %v742 = vadd.f32 %v733, %v740
          %s743 = sld [smem:[#allocation5 + $0x14]]
          %s744 = sld [smem:[#allocation5 + $0x45]]
          %v745 = vstv %s743
          %v746 = vstv %s744
          %v747 = vsel %vm447, %v745, %v746
          %v748 = vmul.f32 %v747, %v531
          %v749 = vmul.f32 %v747, %v532
          %v750 = vadd.f32 %v741, %v748
          %v751 = vadd.f32 %v742, %v749
          %752 = vrot.lane.b32.xlu0 %v750, 16
          %v753 = vpop.permute.xlu0 %752
          %754 = vrot.lane.b32.xlu0 %v751, 16
          %v755 = vpop.permute.xlu0 %754
          %vm756 = vcmp.lt.s32.totalorder %v331, 16
          %v757 = vsel %vm756, %v753, %v755
          %v758 = vsel %vm756, %v755, %v753
          %v759 = vsel %vm413, 1, 0
          %v760 = vsel %vm414, 1, 0
          %vm761 = vcmp.eq.s32.totalorder %v759, 1
          %vm762 = vcmp.eq.s32.totalorder %v760, 1
          %v763 = vsel %vm761, %v758, 0.0
          %v764 = vsel %vm762, %v757, 0.0
          %v765 = vadd.f32 %v687, %v763
          %v766 = vadd.f32 %v688, %v764
          %s767 = sld [smem:[#allocation5 + $0x15]]
          %s768 = sld [smem:[#allocation5 + $0x46]]
          %v769 = vstv %s767
          %v770 = vstv %s768
          %v771 = vsel %vm447, %v769, %v770
          %v772 = vmul.f32 %v771, %v460
          %v773 = vmul.f32 %v771, %v461
          %v774 = vadd.f32 %v772, 0.0
          %v775 = vadd.f32 %v773, 0.0
          %s776 = sld [smem:[#allocation5 + $0x16]]
          %s777 = sld [smem:[#allocation5 + $0x47]]
          %v778 = vstv %s776
          %v779 = vstv %s777
          %v780 = vsel %vm447, %v778, %v779
          %v781 = vmul.f32 %v780, %v473
          %v782 = vmul.f32 %v780, %v474
          %v783 = vadd.f32 %v774, %v781
          %v784 = vadd.f32 %v775, %v782
          %s785 = sld [smem:[#allocation5 + $0x17]]
          %s786 = sld [smem:[#allocation5 + $0x48]]
          %v787 = vstv %s785
          %v788 = vstv %s786
          %v789 = vsel %vm447, %v787, %v788
          %v790 = vmul.f32 %v789, %v486
          %v791 = vmul.f32 %v789, %v487
          %v792 = vadd.f32 %v783, %v790
          %v793 = vadd.f32 %v784, %v791
          %s794 = sld [smem:[#allocation5 + $0x18]]
          %s795 = sld [smem:[#allocation5 + $0x49]]
          %v796 = vstv %s794
          %v797 = vstv %s795
          %v798 = vsel %vm447, %v796, %v797
          %v799 = vmul.f32 %v798, %v492
          %v800 = vmul.f32 %v798, %v493
          %v801 = vadd.f32 %v792, %v799
          %v802 = vadd.f32 %v793, %v800
          %s803 = sld [smem:[#allocation5 + $0x19]]
          %s804 = sld [smem:[#allocation5 + $0x4a]]
          %v805 = vstv %s803
          %v806 = vstv %s804
          %v807 = vsel %vm447, %v805, %v806
          %v808 = vmul.f32 %v807, %v505
          %v809 = vmul.f32 %v807, %v506
          %v810 = vadd.f32 %v801, %v808
          %v811 = vadd.f32 %v802, %v809
          %s812 = sld [smem:[#allocation5 + $0x1a]]
          %s813 = sld [smem:[#allocation5 + $0x4b]]
          %v814 = vstv %s812
          %v815 = vstv %s813
          %v816 = vsel %vm447, %v814, %v815
          %v817 = vmul.f32 %v816, %v518
          %v818 = vmul.f32 %v816, %v519
          %v819 = vadd.f32 %v810, %v817
          %v820 = vadd.f32 %v811, %v818
          %s821 = sld [smem:[#allocation5 + $0x1b]]
          %s822 = sld [smem:[#allocation5 + $0x4c]]
          %v823 = vstv %s821
          %v824 = vstv %s822
          %v825 = vsel %vm447, %v823, %v824
          %v826 = vmul.f32 %v825, %v531
          %v827 = vmul.f32 %v825, %v532
          %v828 = vadd.f32 %v819, %v826
          %v829 = vadd.f32 %v820, %v827
          %v830 = vsel %vm419, 1, 0
          %v831 = vsel %vm420, 1, 0
          %vm832 = vcmp.eq.s32.totalorder %v830, 1
          %vm833 = vcmp.eq.s32.totalorder %v831, 1
          %v834 = vsel %vm832, %v828, 0.0
          %v835 = vsel %vm833, %v829, 0.0
          %v836 = vadd.f32 %v765, %v834
          %v837 = vadd.f32 %v766, %v835
          %s838 = sld [smem:[#allocation5 + $0x1c]]
          %s839 = sld [smem:[#allocation5 + $0x4d]]
          %v840 = vstv %s838
          %v841 = vstv %s839
          %v842 = vsel %vm447, %v840, %v841
          %v843 = vmul.f32 %v842, %v460
          %v844 = vmul.f32 %v842, %v461
          %v845 = vadd.f32 %v843, 0.0
          %v846 = vadd.f32 %v844, 0.0
          %s847 = sld [smem:[#allocation5 + $0x1d]]
          %s848 = sld [smem:[#allocation5 + $0x4e]]
          %v849 = vstv %s847
          %v850 = vstv %s848
          %v851 = vsel %vm447, %v849, %v850
          %v852 = vmul.f32 %v851, %v473
          %v853 = vmul.f32 %v851, %v474
          %v854 = vadd.f32 %v845, %v852
          %v855 = vadd.f32 %v846, %v853
          %s856 = sld [smem:[#allocation5 + $0x1e]]
          %s857 = sld [smem:[#allocation5 + $0x4f]]
          %v858 = vstv %s856
          %v859 = vstv %s857
          %v860 = vsel %vm447, %v858, %v859
          %v861 = vmul.f32 %v860, %v486
          %v862 = vmul.f32 %v860, %v487
          %v863 = vadd.f32 %v854, %v861
          %v864 = vadd.f32 %v855, %v862
          %s865 = sld [smem:[#allocation5 + $0x1f]]
          %s866 = sld [smem:[#allocation5 + $0x50]]
          %v867 = vstv %s865
          %v868 = vstv %s866
          %v869 = vsel %vm447, %v867, %v868
          %v870 = vmul.f32 %v869, %v492
          %v871 = vmul.f32 %v869, %v493
          %v872 = vadd.f32 %v863, %v870
          %v873 = vadd.f32 %v864, %v871
          %s874 = sld [smem:[#allocation5 + $0x20]]
          %s875 = sld [smem:[#allocation5 + $0x51]]
          %v876 = vstv %s874
          %v877 = vstv %s875
          %v878 = vsel %vm447, %v876, %v877
          %v879 = vmul.f32 %v878, %v505
          %v880 = vmul.f32 %v878, %v506
          %v881 = vadd.f32 %v872, %v879
          %v882 = vadd.f32 %v873, %v880
          %s883 = sld [smem:[#allocation5 + $0x21]]
          %s884 = sld [smem:[#allocation5 + $0x52]]
          %v885 = vstv %s883
          %v886 = vstv %s884
          %v887 = vsel %vm447, %v885, %v886
          %v888 = vmul.f32 %v887, %v518
          %v889 = vmul.f32 %v887, %v519
          %v890 = vadd.f32 %v881, %v888
          %v891 = vadd.f32 %v882, %v889
          %s892 = sld [smem:[#allocation5 + $0x22]]
          %s893 = sld [smem:[#allocation5 + $0x53]]
          %v894 = vstv %s892
          %v895 = vstv %s893
          %v896 = vsel %vm447, %v894, %v895
          %v897 = vmul.f32 %v896, %v531
          %v898 = vmul.f32 %v896, %v532
          %v899 = vadd.f32 %v890, %v897
          %v900 = vadd.f32 %v891, %v898
          %901 = vrot.lane.b32.xlu0 %v899, 112
          %v902 = vpop.permute.xlu0 %901
          %903 = vrot.lane.b32.xlu0 %v900, 112
          %v904 = vpop.permute.xlu0 %903
          %vm905 = vcmp.lt.s32.totalorder %v331, 112
          %v906 = vsel %vm905, %v902, %v904
          %v907 = vsel %vm905, %v904, %v902
          %v908 = vsel %vm427, 1, 0
          %v909 = vsel %vm428, 1, 0
          %vm910 = vcmp.eq.s32.totalorder %v908, 1
          %vm911 = vcmp.eq.s32.totalorder %v909, 1
          %v912 = vsel %vm910, %v906, 0.0
          %v913 = vsel %vm911, %v907, 0.0
          %v914 = vadd.f32 %v836, %v912
          %v915 = vadd.f32 %v837, %v913
          %s916 = sld [smem:[#allocation5 + $0x23]]
          %s917 = sld [smem:[#allocation5 + $0x54]]
          %v918 = vstv %s916
          %v919 = vstv %s917
          %v920 = vsel %vm447, %v918, %v919
          %v921 = vmul.f32 %v920, %v460
          %v922 = vmul.f32 %v920, %v461
          %v923 = vadd.f32 %v921, 0.0
          %v924 = vadd.f32 %v922, 0.0
          %s925 = sld [smem:[#allocation5 + $0x24]]
          %s926 = sld [smem:[#allocation5 + $0x55]]
          %v927 = vstv %s925
          %v928 = vstv %s926
          %v929 = vsel %vm447, %v927, %v928
          %v930 = vmul.f32 %v929, %v473
          %v931 = vmul.f32 %v929, %v474
          %v932 = vadd.f32 %v923, %v930
          %v933 = vadd.f32 %v924, %v931
          %s934 = sld [smem:[#allocation5 + $0x25]]
          %s935 = sld [smem:[#allocation5 + $0x56]]
          %v936 = vstv %s934
          %v937 = vstv %s935
          %v938 = vsel %vm447, %v936, %v937
          %v939 = vmul.f32 %v938, %v486
          %v940 = vmul.f32 %v938, %v487
          %v941 = vadd.f32 %v932, %v939
          %v942 = vadd.f32 %v933, %v940
          %s943 = sld [smem:[#allocation5 + $0x26]]
          %s944 = sld [smem:[#allocation5 + $0x57]]
          %v945 = vstv %s943
          %v946 = vstv %s944
          %v947 = vsel %vm447, %v945, %v946
          %v948 = vmul.f32 %v947, %v492
          %v949 = vmul.f32 %v947, %v493
          %v950 = vadd.f32 %v941, %v948
          %v951 = vadd.f32 %v942, %v949
          %s952 = sld [smem:[#allocation5 + $0x27]]
          %s953 = sld [smem:[#allocation5 + $0x58]]
          %v954 = vstv %s952
          %v955 = vstv %s953
          %v956 = vsel %vm447, %v954, %v955
          %v957 = vmul.f32 %v956, %v505
          %v958 = vmul.f32 %v956, %v506
          %v959 = vadd.f32 %v950, %v957
          %v960 = vadd.f32 %v951, %v958
          %s961 = sld [smem:[#allocation5 + $0x28]]
          %s962 = sld [smem:[#allocation5 + $0x59]]
          %v963 = vstv %s961
          %v964 = vstv %s962
          %v965 = vsel %vm447, %v963, %v964
          %v966 = vmul.f32 %v965, %v518
          %v967 = vmul.f32 %v965, %v519
          %v968 = vadd.f32 %v959, %v966
          %v969 = vadd.f32 %v960, %v967
          %s970 = sld [smem:[#allocation5 + $0x29]]
          %s971 = sld [smem:[#allocation5 + $0x5a]]
          %v972 = vstv %s970
          %v973 = vstv %s971
          %v974 = vsel %vm447, %v972, %v973
          %v975 = vmul.f32 %v974, %v531
          %v976 = vmul.f32 %v974, %v532
          %v977 = vadd.f32 %v968, %v975
          %v978 = vadd.f32 %v969, %v976
          %979 = vrot.lane.b32.xlu0 %v977, 96
          %v980 = vpop.permute.xlu0 %979
          %981 = vrot.lane.b32.xlu0 %v978, 96
          %v982 = vpop.permute.xlu0 %981
          %vm983 = vcmp.lt.s32.totalorder %v331, 96
          %v984 = vsel %vm983, %v980, %v982
          %v985 = vsel %vm983, %v982, %v980
          %v986 = vsel %vm435, 1, 0
          %v987 = vsel %vm436, 1, 0
          %vm988 = vcmp.eq.s32.totalorder %v986, 1
          %vm989 = vcmp.eq.s32.totalorder %v987, 1
          %v990 = vsel %vm988, %v984, 0.0
          %v991 = vsel %vm989, %v985, 0.0
          %v992 = vadd.f32 %v914, %v990
          %v993 = vadd.f32 %v915, %v991
          %s994 = sld [smem:[#allocation5 + $0x2a]]
          %s995 = sld [smem:[#allocation5 + $0x5b]]
          %v996 = vstv %s994
          %v997 = vstv %s995
          %v998 = vsel %vm447, %v996, %v997
          %v999 = vmul.f32 %v998, %v460
          %v1000 = vmul.f32 %v998, %v461
          %v1001 = vadd.f32 %v999, 0.0
          %v1002 = vadd.f32 %v1000, 0.0
          %s1003 = sld [smem:[#allocation5 + $0x2b]]
          %s1004 = sld [smem:[#allocation5 + $0x5c]]
          %v1005 = vstv %s1003
          %v1006 = vstv %s1004
          %v1007 = vsel %vm447, %v1005, %v1006
          %v1008 = vmul.f32 %v1007, %v473
          %v1009 = vmul.f32 %v1007, %v474
          %v1010 = vadd.f32 %v1001, %v1008
          %v1011 = vadd.f32 %v1002, %v1009
          %s1012 = sld [smem:[#allocation5 + $0x2c]]
          %s1013 = sld [smem:[#allocation5 + $0x5d]]
          %v1014 = vstv %s1012
          %v1015 = vstv %s1013
          %v1016 = vsel %vm447, %v1014, %v1015
          %v1017 = vmul.f32 %v1016, %v486
          %v1018 = vmul.f32 %v1016, %v487
          %v1019 = vadd.f32 %v1010, %v1017
          %v1020 = vadd.f32 %v1011, %v1018
          %s1021 = sld [smem:[#allocation5 + $0x2d]]
          %s1022 = sld [smem:[#allocation5 + $0x5e]]
          %v1023 = vstv %s1021
          %v1024 = vstv %s1022
          %v1025 = vsel %vm447, %v1023, %v1024
          %v1026 = vmul.f32 %v1025, %v492
          %v1027 = vmul.f32 %v1025, %v493
          %v1028 = vadd.f32 %v1019, %v1026
          %v1029 = vadd.f32 %v1020, %v1027
          %s1030 = sld [smem:[#allocation5 + $0x2e]]
          %s1031 = sld [smem:[#allocation5 + $0x5f]]
          %v1032 = vstv %s1030
          %v1033 = vstv %s1031
          %v1034 = vsel %vm447, %v1032, %v1033
          %v1035 = vmul.f32 %v1034, %v505
          %v1036 = vmul.f32 %v1034, %v506
          %v1037 = vadd.f32 %v1028, %v1035
          %v1038 = vadd.f32 %v1029, %v1036
          %s1039 = sld [smem:[#allocation5 + $0x2f]]
          %s1040 = sld [smem:[#allocation5 + $0x60]]
          %v1041 = vstv %s1039
          %v1042 = vstv %s1040
          %v1043 = vsel %vm447, %v1041, %v1042
          %v1044 = vmul.f32 %v1043, %v518
          %v1045 = vmul.f32 %v1043, %v519
          %v1046 = vadd.f32 %v1037, %v1044
          %v1047 = vadd.f32 %v1038, %v1045
          %s1048 = sld [smem:[#allocation5 + $0x30]]
          %s1049 = sld [smem:[#allocation5 + $0x61]]
          %v1050 = vstv %s1048
          %v1051 = vstv %s1049
          %v1052 = vsel %vm447, %v1050, %v1051
          %v1053 = vmul.f32 %v1052, %v531
          %v1054 = vmul.f32 %v1052, %v532
          %v1055 = vadd.f32 %v1046, %v1053
          %v1056 = vadd.f32 %v1047, %v1054
          %1057 = vrot.lane.b32.xlu0 %v1055, 80
          %v1058 = vpop.permute.xlu0 %1057
          %1059 = vrot.lane.b32.xlu0 %v1056, 80
          %v1060 = vpop.permute.xlu0 %1059
          %vm1061 = vcmp.lt.s32.totalorder %v331, 80
          %v1062 = vsel %vm1061, %v1058, %v1060
          %v1063 = vsel %vm1061, %v1060, %v1058
          %v1064 = vsel %vm443, 1, 0
          %v1065 = vsel %vm444, 1, 0
          %vm1066 = vcmp.eq.s32.totalorder %v1064, 1
          %vm1067 = vcmp.eq.s32.totalorder %v1065, 1
          %v1068 = vsel %vm1066, %v1062, 0.0
          %v1069 = vsel %vm1067, %v1063, 0.0
          %v1070 = vadd.f32 %v992, %v1068
          %v1071 = vadd.f32 %v993, %v1069
          %v1074 = vrot.slane %v1070, 1
          %v1075 = vrot.slane %v1071, 1
          %v1078 = vadd.f32 %v1070, %v1074
          %v1079 = vadd.f32 %v1071, %v1075
          %v1080 = vstv %s448
          %v1081 = vadd.f32 %v1078, %v1080
          %v1082 = vadd.f32 %v1079, %v1080
          %v1083 = vxor.u32 %v1081, 2147483648
          %v1084 = vxor.u32 %v1082, 2147483648
          %v1085 = vmul.f32 %v1083, 1.442695
          %v1086 = vpow.pop %v1085
          %v1087 = vmul.f32 %v1084, 1.442695
          %v1088 = vpow.pop %v1087
          %v1089 = vadd.f32 %v1086, 1.0
          %v1090 = vadd.f32 %v1088, 1.0
          %v1091 = vrcp.pop %v1089
          %v1092 = vmul.f32 1.0, %v1091
          %v1093 = vrcp.pop %v1090
          %v1094 = vmul.f32 1.0, %v1093
          %v1097 = vcombine.low %v1092, %v1094
          %v1099 = vunpack.c.l.s4 1966171168
          %v1100 = vunpack.c.0.s8 %v1099
          %v1101 = vlaneseq
          %v1102 = vshrl.u32 %v1101, 7
          %v1103 = vsub.s32 %v1100, %v1102
          %v1104 = vrot.slane %v1097, %v1103
          %v1106 = vunpack.c.l.s4 1966171168
          %v1107 = vunpack.c.0.s8 %v1106
          %v1108 = vlaneseq
          %v1109 = vshrl.u32 %v1108, 7
          %v1110 = vsub.s32 %v1107, %v1109
          %v1111 = vrot.slane %v1104, %v1110
          %1113 = vst.msk [vmem:[%s209] sm:$0x3] %vm262, %v1111
        $region44: #{spatial_attention.1} parent=31 // pred_fallthru
          _
        %p1114 = scmp.lt.s32.totalorder %s20, 1
        %s1115 = scalar_select %p1114, %s20, 1
        %s1116 = smul.addr %s1115, 2
        %s1117 = scalar_lea.vmem %s3, %s1116
        // Predicated region
        $region45: #{spatial_attention.1} parent=31 // pred_check
          %p1118 = pneg %p116
        $region46: #{spatial_attention.1} parent=31 // pred_check_branch
          %1120 = sbr.rel (%p1118) target = $region48
        $region47: #{spatial_attention.1} parent=31 // pred_region
          _
        $region48: #{spatial_attention.1} parent=31 // pred_fallthru
          _
      $region32: #{spatial_attention.1} parent=5 // pred_fallthru
        _
      %p1121 = scmp.le.s32.totalorder 2, %s11
      // Predicated region
      $region49: #{spatial_attention.1} parent=5 // pred_check
        %p1122 = pneg %p1121
      $region50: #{spatial_attention.1} parent=5 // pred_check_branch
        %1124 = sbr.rel (%p1122) target = $region52
      $region51: #{spatial_attention.1} parent=5 // pred_region
        %s1125 = ssub.s32 %s11, 2
        // Predicated region
        $region53: #{spatial_attention.1} parent=51 // pred_check
          %p1126 = pneg %p122
        $region54: #{spatial_attention.1} parent=51 // pred_check_branch
          %1128 = sbr.rel (%p1126) target = $region56
        $region55: #{spatial_attention.1} parent=51 // pred_region
          %p1129 = scmp.lt.s32.totalorder %s22, 1
          %s1130 = scalar_select %p1129, %s22, 1
          %s1131 = smul.addr %s1130, 2
          %s1132 = scalar_lea.vmem %s3, %s1131
        $region56: #{spatial_attention.1} parent=51 // pred_fallthru
          _
      $region52: #{spatial_attention.1} parent=5 // pred_fallthru
        _
    $region6: #{spatial_attention.1} parent=1 // loop_footer
      %s15 = sadd.s32 1, %s11
    $region7: #{spatial_attention.1} parent=1 // loop_footer_branch
      %10 = sbr.rel target = $region3
    $region8: #{spatial_attention.1} parent=1 // loop_exit
      _
    %1133 = vsyncpa [#allocation6], 1
    %s1134 = scalar_lea.sflag [#allocation6], 1
    %1135 = vsyncpa %s1134, 1

</llo_original>
